<compile_context>
chip_gen: v6e
topology: v6e:2x2x1
jax: 0.10.0
libtpu: 0.0.40
codegen_flags: <defaults>
</compile_context>

<pallas_src>
import jax
import jax.numpy as jnp
import numpy as np
from jax.experimental import pallas as pl
from jax.experimental.pallas import tpu as pltpu

# ----- model dimensions (small, consistent with the wrapper's forward) -----
B, C_IN, H, W = 2, 4, 16, 16          # image  [B, C_in, H, W]
C_OUT = 8                             # conv output channels
D_SEQ = 8                             # external sequence feature dim
T = W                                 # RNN time steps == image width
D_IN = C_OUT + D_SEQ                  # RNN input feature dim
HID = 32                              # RNN hidden size
N_CLASSES = 16                        # classifier output

# ----- packed weight-slab row offsets (16-aligned for bf16 sublane packing) --
R_WT = 0                              # Toeplitz conv weights   [3*H*C_IN, H*C_OUT]
R_MWXF = R_WT + 3 * H * C_IN          # m_mean @ Wx_feats       [H*C_OUT, HID]
R_WXS = R_MWXF + H * C_OUT            # Wx_seq                  [D_SEQ, HID]
R_WH = R_WXS + 16                     # recurrent weights       [HID, HID]
R_WO = R_WH + HID                     # classifier weights      [HID, N_CLASSES]
R_TOT = R_WO + HID                    # = 400 rows total

# TODO(synk): the original `base` module is external; this synthetic CRNN base
# reproduces a canonical CRNN forward (conv features -> RNN -> logits), not a
# specific checkpointed architecture.


# --------------------------- fused Pallas kernel ----------------------------
def crnn_fused_kernel(x_ref, seq_ref, w_ref, b_ref, out_ref, hs_ref):
    f32, bf16 = jnp.float32, jnp.bfloat16

    # ---- 3x3 conv (pad=1) as ONE K=192 Toeplitz matmul ----
    # x_ref: [W*B, 3*H*C_IN] (taps pre-shifted/stacked host-side, time-major);
    # H zero-padding is folded into the Toeplitz weights, W padding in wrapper.
    y = jnp.dot(x_ref[...], w_ref[R_WT:R_WT + 3 * H * C_IN, :],
                preferred_element_type=f32)                    # [W*B, H*C_OUT]
    y = jnp.maximum(y + b_ref[0:1, :], 0.0)                    # bias + ReLU (f32)

    # ---- H-mean folded into RNN input projection (m_mean @ Wx_f host-side) ----
    prex = (jnp.dot(y.astype(bf16), w_ref[R_MWXF:R_MWXF + H * C_OUT, 0:HID],
                    preferred_element_type=f32)
            + jnp.dot(seq_ref[...], w_ref[R_WXS:R_WXS + D_SEQ, 0:HID],
                      preferred_element_type=f32)
            + b_ref[1:2, 0:HID])                               # [T*B, HID], time-major

    # ---- recurrence: one MXU push + tanh per step; states spilled to scratch ----
    wh = w_ref[R_WH:R_WH + HID, 0:HID]                         # [HID, HID] bf16
    h = jnp.zeros((B, HID), f32)
    for t in range(T):                                         # static, unrolled
        pre_t = prex[t * B:(t + 1) * B, :]                     # contiguous static slice
        h = jnp.tanh(pre_t + jnp.dot(h.astype(bf16), wh,
                                     preferred_element_type=f32))
        hs_ref[t * B:(t + 1) * B, :] = h                       # off the serial chain

    # ---- batched classifier over all (t, b) hidden states ----
    out_ref[...] = (jnp.dot(hs_ref[...].astype(bf16),
                            w_ref[R_WO:R_WO + HID, 0:N_CLASSES],
                            preferred_element_type=f32)
                    + b_ref[2:3, 0:N_CLASSES])                 # [T*B, N_CLASSES]


_COST = pl.CostEstimate(
    flops=2 * (W * B * (3 * H * C_IN) * (H * C_OUT)            # conv Toeplitz dot
               + T * B * (H * C_OUT) * HID                     # folded input proj
               + T * B * D_SEQ * HID                           # seq proj
               + T * B * HID * HID                             # recurrence
               + T * B * HID * N_CLASSES),                     # classifier
    transcendentals=T * B * HID,                               # tanh
    bytes_accessed=(W * B * 3 * H * C_IN * 2 + T * B * D_SEQ * 2
                    + R_TOT * 128 * 2 + 8 * 128 * 4 + T * B * N_CLASSES * 4),
)


def crnn_forward_call(x_cat, seq2d, params):
    return pl.pallas_call(
        crnn_fused_kernel,
        out_shape=jax.ShapeDtypeStruct((T * B, N_CLASSES), jnp.float32),
        in_specs=[pl.BlockSpec(memory_space=pltpu.MemorySpace.VMEM)] * 4,
        out_specs=pl.BlockSpec(memory_space=pltpu.MemorySpace.VMEM),
        scratch_shapes=[pltpu.VMEM((T * B, HID), jnp.float32)],
        cost_estimate=_COST,
    )(x_cat, seq2d, params["w_slab"], params["b_slab"])


# ------------------------------ parameters ----------------------------------
def init_params():
    """Deterministic synthetic parameters, repacked host-side for the kernel."""
    kp = jax.random.PRNGKey(42)
    ks = jax.random.split(kp, 6)
    w_conv = jax.random.normal(ks[0], (3, 3, C_IN, C_OUT), jnp.float32) * 0.1
    b_conv = jax.random.normal(ks[1], (C_OUT,), jnp.float32) * 0.1
    wx = jax.random.normal(ks[2], (D_IN, HID), jnp.float32) * 0.1
    wh = jax.random.normal(ks[3], (HID, HID), jnp.float32) * 0.1
    bh = jnp.zeros((HID,), jnp.float32)     # b_ih + b_hh summed into one bias
    wo = jax.random.normal(ks[4], (HID, N_CLASSES), jnp.float32) * 0.1
    bo = jax.random.normal(ks[5], (N_CLASSES,), jnp.float32) * 0.1

    # --- one-time host-side repack into MXU/lane-friendly forms ---
    wc = np.asarray(w_conv)
    # Toeplitz-expanded conv weights stacked over the 3 horizontal taps:
    # contracts over (dj, h', c) and produces all (h, co) at once; out-of-range
    # h' entries stay zero, which implements the vertical zero-padding.
    w_toep = np.zeros((3, H * C_IN, H * C_OUT), np.float32)
    for dj in range(3):
        for h in range(H):
            for di in range(3):
                hp = h + di - 1
                if 0 <= hp < H:
                    w_toep[dj, hp * C_IN:(hp + 1) * C_IN,
                           h * C_OUT:(h + 1) * C_OUT] = wc[di, dj]
    w_toep = w_toep.reshape(3 * H * C_IN, H * C_OUT)

    # mean-over-H matrix, folded into the feats part of Wx host-side.
    m_mean = np.zeros((H * C_OUT, C_OUT), np.float32)
    for h in range(H):
        m_mean[h * C_OUT:(h + 1) * C_OUT, :] = np.eye(C_OUT, dtype=np.float32) / H
    wx_np = np.asarray(wx)
    m_wxf = m_mean @ wx_np[:C_OUT]          # [H*C_OUT, HID]
    wx_s = wx_np[C_OUT:]                    # [D_SEQ, HID]

    # --- pack ALL matmul weights into one bf16 [R_TOT, 128] slab ---
    w_slab = np.zeros((R_TOT, 128), np.float32)
    w_slab[R_WT:R_WT + 3 * H * C_IN, :H * C_OUT] = w_toep
    w_slab[R_MWXF:R_MWXF + H * C_OUT, :HID] = m_wxf
    w_slab[R_WXS:R_WXS + D_SEQ, :HID] = wx_s
    w_slab[R_WH:R_WH + HID, :HID] = np.asarray(wh)
    w_slab[R_WO:R_WO + HID, :N_CLASSES] = np.asarray(wo)

    # --- small f32 bias slab (elementwise math stays f32) ---
    b_slab = np.zeros((8, 128), np.float32)
    b_slab[0, :H * C_OUT] = np.tile(np.asarray(b_conv), H)   # col layout h*C_OUT+co
    b_slab[1, :HID] = np.asarray(bh)
    b_slab[2, :N_CLASSES] = np.asarray(bo)

    return dict(w_slab=jnp.asarray(w_slab, jnp.bfloat16),
                b_slab=jnp.asarray(b_slab, jnp.float32))


# ------------------------------ wrapper --------------------------------------
def crnn_wrapper_forward(inp, params):
    """Mirrors CRNNWrapper.forward: unpack (img, seq), run the fused base."""
    img, seq = tuple(inp)                                  # NCHW image, [B,T,D_SEQ] seq
    # Tiny layout prep (time-major): NCHW -> [W, B, H, C] -> pad W -> pre-shift
    # the 3 conv taps and stack them so the conv is ONE K=192 matmul in-kernel.
    x = jnp.transpose(img, (3, 0, 2, 1))                   # [W, B, H, C_IN]
    x = jnp.pad(x, ((1, 1), (0, 0), (0, 0), (0, 0)))       # pad W; H-pad is in w_toep
    x_cat = jnp.stack([x[dj:dj + W] for dj in range(3)], axis=2)   # [W, B, 3, H, C_IN]
    x_cat = x_cat.reshape(W * B, 3 * H * C_IN).astype(jnp.bfloat16)
    seq2d = jnp.transpose(seq, (1, 0, 2)).reshape(T * B, D_SEQ).astype(jnp.bfloat16)

    out2d = crnn_forward_call(x_cat, seq2d, params)        # [T*B, N_CLASSES], time-major
    return out2d.reshape(T, B, N_CLASSES).transpose(1, 0, 2)   # [B, T, N_CLASSES]


if __name__ == "__main__":
    key = jax.random.PRNGKey(0)
    k_img, k_seq = jax.random.split(key)
    img = jax.random.normal(k_img, (B, C_IN, H, W), jnp.float32)   # NCHW like PyTorch
    seq = jax.random.normal(k_seq, (B, T, D_SEQ), jnp.float32)
    params = init_params()

    fwd = jax.jit(lambda i, s: crnn_wrapper_forward((i, s), params))
    out = fwd(img, seq)
    jax.block_until_ready(out)
    assert out.shape == (B, T, N_CLASSES) and out.dtype == jnp.float32
    assert bool(jnp.all(jnp.isfinite(out)))
    print("KERNEL_OK")
</pallas_src>

<mosaic_0001>
module attributes {stable_mosaic.version = 11 : i64} {
  func.func @crnn_fused_kernel(%arg0: memref<32x192xbf16, #tpu.memory_space<vmem>>, %arg1: memref<32x8xbf16, #tpu.memory_space<vmem>>, %arg2: memref<400x128xbf16, #tpu.memory_space<vmem>>, %arg3: memref<8x128xf32, #tpu.memory_space<vmem>>, %arg4: memref<32x16xf32, #tpu.memory_space<vmem>>, %arg5: memref<32x32xf32, #tpu.memory_space<vmem>>) attributes {dimension_semantics = [], scalar_prefetch = 0 : i64, scratch_operands = 1 : i64, tpu.core_type = #tpu.core_type<tc>} {
    %c0 = arith.constant 0 : index
    %c0_0 = arith.constant 0 : index
    %0 = vector.load %arg0[%c0, %c0_0] : memref<32x192xbf16, #tpu.memory_space<vmem>>, vector<32x192xbf16>
    %c0_1 = arith.constant 0 : index
    %c0_2 = arith.constant 0 : index
    %1 = vector.load %arg2[%c0_1, %c0_2] : memref<400x128xbf16, #tpu.memory_space<vmem>>, vector<192x128xbf16>
    %cst = arith.constant dense<0.000000e+00> : vector<32x128xf32>
    %2 = tpu.matmul %0, %1, %cst {dimension_numbers = #tpu.dot_dimension_numbers<[1], [0], [0], [1], [0, 0, 1, 1], [], []>} : vector<32x192xbf16>, vector<192x128xbf16>, vector<32x128xf32> -> vector<32x128xf32>
    %c0_3 = arith.constant 0 : index
    %c0_4 = arith.constant 0 : index
    %3 = vector.load %arg3[%c0_3, %c0_4] : memref<8x128xf32, #tpu.memory_space<vmem>>, vector<1x128xf32>
    %4 = vector.broadcast %3 : vector<1x128xf32> to vector<32x128xf32>
    %5 = arith.addf %2, %4 : vector<32x128xf32>
    %cst_5 = arith.constant 0.000000e+00 : f32
    %6 = vector.broadcast %cst_5 : f32 to vector<32x128xf32>
    %7 = arith.maximumf %5, %6 : vector<32x128xf32>
    %8 = arith.truncf %7 : vector<32x128xf32> to vector<32x128xbf16>
    %c192 = arith.constant 192 : index
    %c0_6 = arith.constant 0 : index
    %9 = vector.load %arg2[%c192, %c0_6] : memref<400x128xbf16, #tpu.memory_space<vmem>>, vector<128x32xbf16>
    %cst_7 = arith.constant dense<0.000000e+00> : vector<32x32xf32>
    %10 = tpu.matmul %8, %9, %cst_7 {dimension_numbers = #tpu.dot_dimension_numbers<[1], [0], [0], [1], [0, 0, 1, 1], [], []>} : vector<32x128xbf16>, vector<128x32xbf16>, vector<32x32xf32> -> vector<32x32xf32>
    %c0_8 = arith.constant 0 : index
    %c0_9 = arith.constant 0 : index
    %11 = vector.load %arg1[%c0_8, %c0_9] : memref<32x8xbf16, #tpu.memory_space<vmem>>, vector<32x8xbf16>
    %c320 = arith.constant 320 : index
    %c0_10 = arith.constant 0 : index
    %12 = vector.load %arg2[%c320, %c0_10] : memref<400x128xbf16, #tpu.memory_space<vmem>>, vector<8x32xbf16>
    %cst_11 = arith.constant dense<0.000000e+00> : vector<32x32xf32>
    %13 = tpu.matmul %11, %12, %cst_11 {dimension_numbers = #tpu.dot_dimension_numbers<[1], [0], [0], [1], [0, 0, 1, 1], [], []>} : vector<32x8xbf16>, vector<8x32xbf16>, vector<32x32xf32> -> vector<32x32xf32>
    %14 = arith.addf %10, %13 : vector<32x32xf32>
    %c1 = arith.constant 1 : index
    %c0_12 = arith.constant 0 : index
    %15 = vector.load %arg3[%c1, %c0_12] : memref<8x128xf32, #tpu.memory_space<vmem>>, vector<1x32xf32>
    %16 = vector.broadcast %15 : vector<1x32xf32> to vector<32x32xf32>
    %17 = arith.addf %14, %16 : vector<32x32xf32>
    %c336 = arith.constant 336 : index
    %c0_13 = arith.constant 0 : index
    %18 = vector.load %arg2[%c336, %c0_13] : memref<400x128xbf16, #tpu.memory_space<vmem>>, vector<32x32xbf16>
    %cst_14 = arith.constant 0.000000e+00 : f32
    %19 = vector.broadcast %cst_14 : f32 to vector<2x32xf32>
    %20 = vector.extract_strided_slice %17 {offsets = [0, 0], sizes = [2, 32], strides = [1, 1]} : vector<32x32xf32> to vector<2x32xf32>
    %21 = arith.truncf %19 : vector<2x32xf32> to vector<2x32xbf16>
    %cst_15 = arith.constant dense<0.000000e+00> : vector<2x32xf32>
    %22 = tpu.matmul %21, %18, %cst_15 {dimension_numbers = #tpu.dot_dimension_numbers<[1], [0], [0], [1], [0, 0, 1, 1], [], []>} : vector<2x32xbf16>, vector<32x32xbf16>, vector<2x32xf32> -> vector<2x32xf32>
    %23 = arith.addf %20, %22 : vector<2x32xf32>
    %24 = math.tanh %23 : vector<2x32xf32>
    %c0_16 = arith.constant 0 : index
    %c0_17 = arith.constant 0 : index
    %25 = vector.load %arg5[%c0_16, %c0_17] : memref<32x32xf32, #tpu.memory_space<vmem>>, vector<2x32xf32>
    tpu.vector_store %arg5[%c0_16, %c0_17], %24 {strides = array<i32>} : memref<32x32xf32, #tpu.memory_space<vmem>>, vector<2x32xf32>,
    %26 = vector.extract_strided_slice %17 {offsets = [2, 0], sizes = [2, 32], strides = [1, 1]} : vector<32x32xf32> to vector<2x32xf32>
    %27 = arith.truncf %24 : vector<2x32xf32> to vector<2x32xbf16>
    %cst_18 = arith.constant dense<0.000000e+00> : vector<2x32xf32>
    %28 = tpu.matmul %27, %18, %cst_18 {dimension_numbers = #tpu.dot_dimension_numbers<[1], [0], [0], [1], [0, 0, 1, 1], [], []>} : vector<2x32xbf16>, vector<32x32xbf16>, vector<2x32xf32> -> vector<2x32xf32>
    %29 = arith.addf %26, %28 : vector<2x32xf32>
    %30 = math.tanh %29 : vector<2x32xf32>
    %c2 = arith.constant 2 : index
    %c0_19 = arith.constant 0 : index
    %31 = vector.load %arg5[%c2, %c0_19] : memref<32x32xf32, #tpu.memory_space<vmem>>, vector<2x32xf32>
    tpu.vector_store %arg5[%c2, %c0_19], %30 {strides = array<i32>} : memref<32x32xf32, #tpu.memory_space<vmem>>, vector<2x32xf32>,
    %32 = vector.extract_strided_slice %17 {offsets = [4, 0], sizes = [2, 32], strides = [1, 1]} : vector<32x32xf32> to vector<2x32xf32>
    %33 = arith.truncf %30 : vector<2x32xf32> to vector<2x32xbf16>
    %cst_20 = arith.constant dense<0.000000e+00> : vector<2x32xf32>
    %34 = tpu.matmul %33, %18, %cst_20 {dimension_numbers = #tpu.dot_dimension_numbers<[1], [0], [0], [1], [0, 0, 1, 1], [], []>} : vector<2x32xbf16>, vector<32x32xbf16>, vector<2x32xf32> -> vector<2x32xf32>
    %35 = arith.addf %32, %34 : vector<2x32xf32>
    %36 = math.tanh %35 : vector<2x32xf32>
    %c4 = arith.constant 4 : index
    %c0_21 = arith.constant 0 : index
    %37 = vector.load %arg5[%c4, %c0_21] : memref<32x32xf32, #tpu.memory_space<vmem>>, vector<2x32xf32>
    tpu.vector_store %arg5[%c4, %c0_21], %36 {strides = array<i32>} : memref<32x32xf32, #tpu.memory_space<vmem>>, vector<2x32xf32>,
    %38 = vector.extract_strided_slice %17 {offsets = [6, 0], sizes = [2, 32], strides = [1, 1]} : vector<32x32xf32> to vector<2x32xf32>
    %39 = arith.truncf %36 : vector<2x32xf32> to vector<2x32xbf16>
    %cst_22 = arith.constant dense<0.000000e+00> : vector<2x32xf32>
    %40 = tpu.matmul %39, %18, %cst_22 {dimension_numbers = #tpu.dot_dimension_numbers<[1], [0], [0], [1], [0, 0, 1, 1], [], []>} : vector<2x32xbf16>, vector<32x32xbf16>, vector<2x32xf32> -> vector<2x32xf32>
    %41 = arith.addf %38, %40 : vector<2x32xf32>
    %42 = math.tanh %41 : vector<2x32xf32>
    %c6 = arith.constant 6 : index
    %c0_23 = arith.constant 0 : index
    %43 = vector.load %arg5[%c6, %c0_23] : memref<32x32xf32, #tpu.memory_space<vmem>>, vector<2x32xf32>
    tpu.vector_store %arg5[%c6, %c0_23], %42 {strides = array<i32>} : memref<32x32xf32, #tpu.memory_space<vmem>>, vector<2x32xf32>,
    %44 = vector.extract_strided_slice %17 {offsets = [8, 0], sizes = [2, 32], strides = [1, 1]} : vector<32x32xf32> to vector<2x32xf32>
    %45 = arith.truncf %42 : vector<2x32xf32> to vector<2x32xbf16>
    %cst_24 = arith.constant dense<0.000000e+00> : vector<2x32xf32>
    %46 = tpu.matmul %45, %18, %cst_24 {dimension_numbers = #tpu.dot_dimension_numbers<[1], [0], [0], [1], [0, 0, 1, 1], [], []>} : vector<2x32xbf16>, vector<32x32xbf16>, vector<2x32xf32> -> vector<2x32xf32>
    %47 = arith.addf %44, %46 : vector<2x32xf32>
    %48 = math.tanh %47 : vector<2x32xf32>
    %c8 = arith.constant 8 : index
    %c0_25 = arith.constant 0 : index
    %49 = vector.load %arg5[%c8, %c0_25] : memref<32x32xf32, #tpu.memory_space<vmem>>, vector<2x32xf32>
    tpu.vector_store %arg5[%c8, %c0_25], %48 {strides = array<i32>} : memref<32x32xf32, #tpu.memory_space<vmem>>, vector<2x32xf32>,
    %50 = vector.extract_strided_slice %17 {offsets = [10, 0], sizes = [2, 32], strides = [1, 1]} : vector<32x32xf32> to vector<2x32xf32>
    %51 = arith.truncf %48 : vector<2x32xf32> to vector<2x32xbf16>
    %cst_26 = arith.constant dense<0.000000e+00> : vector<2x32xf32>
    %52 = tpu.matmul %51, %18, %cst_26 {dimension_numbers = #tpu.dot_dimension_numbers<[1], [0], [0], [1], [0, 0, 1, 1], [], []>} : vector<2x32xbf16>, vector<32x32xbf16>, vector<2x32xf32> -> vector<2x32xf32>
    %53 = arith.addf %50, %52 : vector<2x32xf32>
    %54 = math.tanh %53 : vector<2x32xf32>
    %c10 = arith.constant 10 : index
    %c0_27 = arith.constant 0 : index
    %55 = vector.load %arg5[%c10, %c0_27] : memref<32x32xf32, #tpu.memory_space<vmem>>, vector<2x32xf32>
    tpu.vector_store %arg5[%c10, %c0_27], %54 {strides = array<i32>} : memref<32x32xf32, #tpu.memory_space<vmem>>, vector<2x32xf32>,
    %56 = vector.extract_strided_slice %17 {offsets = [12, 0], sizes = [2, 32], strides = [1, 1]} : vector<32x32xf32> to vector<2x32xf32>
    %57 = arith.truncf %54 : vector<2x32xf32> to vector<2x32xbf16>
    %cst_28 = arith.constant dense<0.000000e+00> : vector<2x32xf32>
    %58 = tpu.matmul %57, %18, %cst_28 {dimension_numbers = #tpu.dot_dimension_numbers<[1], [0], [0], [1], [0, 0, 1, 1], [], []>} : vector<2x32xbf16>, vector<32x32xbf16>, vector<2x32xf32> -> vector<2x32xf32>
    %59 = arith.addf %56, %58 : vector<2x32xf32>
    %60 = math.tanh %59 : vector<2x32xf32>
    %c12 = arith.constant 12 : index
    %c0_29 = arith.constant 0 : index
    %61 = vector.load %arg5[%c12, %c0_29] : memref<32x32xf32, #tpu.memory_space<vmem>>, vector<2x32xf32>
    tpu.vector_store %arg5[%c12, %c0_29], %60 {strides = array<i32>} : memref<32x32xf32, #tpu.memory_space<vmem>>, vector<2x32xf32>,
    %62 = vector.extract_strided_slice %17 {offsets = [14, 0], sizes = [2, 32], strides = [1, 1]} : vector<32x32xf32> to vector<2x32xf32>
    %63 = arith.truncf %60 : vector<2x32xf32> to vector<2x32xbf16>
    %cst_30 = arith.constant dense<0.000000e+00> : vector<2x32xf32>
    %64 = tpu.matmul %63, %18, %cst_30 {dimension_numbers = #tpu.dot_dimension_numbers<[1], [0], [0], [1], [0, 0, 1, 1], [], []>} : vector<2x32xbf16>, vector<32x32xbf16>, vector<2x32xf32> -> vector<2x32xf32>
    %65 = arith.addf %62, %64 : vector<2x32xf32>
    %66 = math.tanh %65 : vector<2x32xf32>
    %c14 = arith.constant 14 : index
    %c0_31 = arith.constant 0 : index
    %67 = vector.load %arg5[%c14, %c0_31] : memref<32x32xf32, #tpu.memory_space<vmem>>, vector<2x32xf32>
    tpu.vector_store %arg5[%c14, %c0_31], %66 {strides = array<i32>} : memref<32x32xf32, #tpu.memory_space<vmem>>, vector<2x32xf32>,
    %68 = vector.extract_strided_slice %17 {offsets = [16, 0], sizes = [2, 32], strides = [1, 1]} : vector<32x32xf32> to vector<2x32xf32>
    %69 = arith.truncf %66 : vector<2x32xf32> to vector<2x32xbf16>
    %cst_32 = arith.constant dense<0.000000e+00> : vector<2x32xf32>
    %70 = tpu.matmul %69, %18, %cst_32 {dimension_numbers = #tpu.dot_dimension_numbers<[1], [0], [0], [1], [0, 0, 1, 1], [], []>} : vector<2x32xbf16>, vector<32x32xbf16>, vector<2x32xf32> -> vector<2x32xf32>
    %71 = arith.addf %68, %70 : vector<2x32xf32>
    %72 = math.tanh %71 : vector<2x32xf32>
    %c16 = arith.constant 16 : index
    %c0_33 = arith.constant 0 : index
    %73 = vector.load %arg5[%c16, %c0_33] : memref<32x32xf32, #tpu.memory_space<vmem>>, vector<2x32xf32>
    tpu.vector_store %arg5[%c16, %c0_33], %72 {strides = array<i32>} : memref<32x32xf32, #tpu.memory_space<vmem>>, vector<2x32xf32>,
    %74 = vector.extract_strided_slice %17 {offsets = [18, 0], sizes = [2, 32], strides = [1, 1]} : vector<32x32xf32> to vector<2x32xf32>
    %75 = arith.truncf %72 : vector<2x32xf32> to vector<2x32xbf16>
    %cst_34 = arith.constant dense<0.000000e+00> : vector<2x32xf32>
    %76 = tpu.matmul %75, %18, %cst_34 {dimension_numbers = #tpu.dot_dimension_numbers<[1], [0], [0], [1], [0, 0, 1, 1], [], []>} : vector<2x32xbf16>, vector<32x32xbf16>, vector<2x32xf32> -> vector<2x32xf32>
    %77 = arith.addf %74, %76 : vector<2x32xf32>
    %78 = math.tanh %77 : vector<2x32xf32>
    %c18 = arith.constant 18 : index
    %c0_35 = arith.constant 0 : index
    %79 = vector.load %arg5[%c18, %c0_35] : memref<32x32xf32, #tpu.memory_space<vmem>>, vector<2x32xf32>
    tpu.vector_store %arg5[%c18, %c0_35], %78 {strides = array<i32>} : memref<32x32xf32, #tpu.memory_space<vmem>>, vector<2x32xf32>,
    %80 = vector.extract_strided_slice %17 {offsets = [20, 0], sizes = [2, 32], strides = [1, 1]} : vector<32x32xf32> to vector<2x32xf32>
    %81 = arith.truncf %78 : vector<2x32xf32> to vector<2x32xbf16>
    %cst_36 = arith.constant dense<0.000000e+00> : vector<2x32xf32>
    %82 = tpu.matmul %81, %18, %cst_36 {dimension_numbers = #tpu.dot_dimension_numbers<[1], [0], [0], [1], [0, 0, 1, 1], [], []>} : vector<2x32xbf16>, vector<32x32xbf16>, vector<2x32xf32> -> vector<2x32xf32>
    %83 = arith.addf %80, %82 : vector<2x32xf32>
    %84 = math.tanh %83 : vector<2x32xf32>
    %c20 = arith.constant 20 : index
    %c0_37 = arith.constant 0 : index
    %85 = vector.load %arg5[%c20, %c0_37] : memref<32x32xf32, #tpu.memory_space<vmem>>, vector<2x32xf32>
    tpu.vector_store %arg5[%c20, %c0_37], %84 {strides = array<i32>} : memref<32x32xf32, #tpu.memory_space<vmem>>, vector<2x32xf32>,
    %86 = vector.extract_strided_slice %17 {offsets = [22, 0], sizes = [2, 32], strides = [1, 1]} : vector<32x32xf32> to vector<2x32xf32>
    %87 = arith.truncf %84 : vector<2x32xf32> to vector<2x32xbf16>
    %cst_38 = arith.constant dense<0.000000e+00> : vector<2x32xf32>
    %88 = tpu.matmul %87, %18, %cst_38 {dimension_numbers = #tpu.dot_dimension_numbers<[1], [0], [0], [1], [0, 0, 1, 1], [], []>} : vector<2x32xbf16>, vector<32x32xbf16>, vector<2x32xf32> -> vector<2x32xf32>
    %89 = arith.addf %86, %88 : vector<2x32xf32>
    %90 = math.tanh %89 : vector<2x32xf32>
    %c22 = arith.constant 22 : index
    %c0_39 = arith.constant 0 : index
    %91 = vector.load %arg5[%c22, %c0_39] : memref<32x32xf32, #tpu.memory_space<vmem>>, vector<2x32xf32>
    tpu.vector_store %arg5[%c22, %c0_39], %90 {strides = array<i32>} : memref<32x32xf32, #tpu.memory_space<vmem>>, vector<2x32xf32>,
    %92 = vector.extract_strided_slice %17 {offsets = [24, 0], sizes = [2, 32], strides = [1, 1]} : vector<32x32xf32> to vector<2x32xf32>
    %93 = arith.truncf %90 : vector<2x32xf32> to vector<2x32xbf16>
    %cst_40 = arith.constant dense<0.000000e+00> : vector<2x32xf32>
    %94 = tpu.matmul %93, %18, %cst_40 {dimension_numbers = #tpu.dot_dimension_numbers<[1], [0], [0], [1], [0, 0, 1, 1], [], []>} : vector<2x32xbf16>, vector<32x32xbf16>, vector<2x32xf32> -> vector<2x32xf32>
    %95 = arith.addf %92, %94 : vector<2x32xf32>
    %96 = math.tanh %95 : vector<2x32xf32>
    %c24 = arith.constant 24 : index
    %c0_41 = arith.constant 0 : index
    %97 = vector.load %arg5[%c24, %c0_41] : memref<32x32xf32, #tpu.memory_space<vmem>>, vector<2x32xf32>
    tpu.vector_store %arg5[%c24, %c0_41], %96 {strides = array<i32>} : memref<32x32xf32, #tpu.memory_space<vmem>>, vector<2x32xf32>,
    %98 = vector.extract_strided_slice %17 {offsets = [26, 0], sizes = [2, 32], strides = [1, 1]} : vector<32x32xf32> to vector<2x32xf32>
    %99 = arith.truncf %96 : vector<2x32xf32> to vector<2x32xbf16>
    %cst_42 = arith.constant dense<0.000000e+00> : vector<2x32xf32>
    %100 = tpu.matmul %99, %18, %cst_42 {dimension_numbers = #tpu.dot_dimension_numbers<[1], [0], [0], [1], [0, 0, 1, 1], [], []>} : vector<2x32xbf16>, vector<32x32xbf16>, vector<2x32xf32> -> vector<2x32xf32>
    %101 = arith.addf %98, %100 : vector<2x32xf32>
    %102 = math.tanh %101 : vector<2x32xf32>
    %c26 = arith.constant 26 : index
    %c0_43 = arith.constant 0 : index
    %103 = vector.load %arg5[%c26, %c0_43] : memref<32x32xf32, #tpu.memory_space<vmem>>, vector<2x32xf32>
    tpu.vector_store %arg5[%c26, %c0_43], %102 {strides = array<i32>} : memref<32x32xf32, #tpu.memory_space<vmem>>, vector<2x32xf32>,
    %104 = vector.extract_strided_slice %17 {offsets = [28, 0], sizes = [2, 32], strides = [1, 1]} : vector<32x32xf32> to vector<2x32xf32>
    %105 = arith.truncf %102 : vector<2x32xf32> to vector<2x32xbf16>
    %cst_44 = arith.constant dense<0.000000e+00> : vector<2x32xf32>
    %106 = tpu.matmul %105, %18, %cst_44 {dimension_numbers = #tpu.dot_dimension_numbers<[1], [0], [0], [1], [0, 0, 1, 1], [], []>} : vector<2x32xbf16>, vector<32x32xbf16>, vector<2x32xf32> -> vector<2x32xf32>
    %107 = arith.addf %104, %106 : vector<2x32xf32>
    %108 = math.tanh %107 : vector<2x32xf32>
    %c28 = arith.constant 28 : index
    %c0_45 = arith.constant 0 : index
    %109 = vector.load %arg5[%c28, %c0_45] : memref<32x32xf32, #tpu.memory_space<vmem>>, vector<2x32xf32>
    tpu.vector_store %arg5[%c28, %c0_45], %108 {strides = array<i32>} : memref<32x32xf32, #tpu.memory_space<vmem>>, vector<2x32xf32>,
    %110 = vector.extract_strided_slice %17 {offsets = [30, 0], sizes = [2, 32], strides = [1, 1]} : vector<32x32xf32> to vector<2x32xf32>
    %111 = arith.truncf %108 : vector<2x32xf32> to vector<2x32xbf16>
    %cst_46 = arith.constant dense<0.000000e+00> : vector<2x32xf32>
    %112 = tpu.matmul %111, %18, %cst_46 {dimension_numbers = #tpu.dot_dimension_numbers<[1], [0], [0], [1], [0, 0, 1, 1], [], []>} : vector<2x32xbf16>, vector<32x32xbf16>, vector<2x32xf32> -> vector<2x32xf32>
    %113 = arith.addf %110, %112 : vector<2x32xf32>
    %114 = math.tanh %113 : vector<2x32xf32>
    %c30 = arith.constant 30 : index
    %c0_47 = arith.constant 0 : index
    %115 = vector.load %arg5[%c30, %c0_47] : memref<32x32xf32, #tpu.memory_space<vmem>>, vector<2x32xf32>
    tpu.vector_store %arg5[%c30, %c0_47], %114 {strides = array<i32>} : memref<32x32xf32, #tpu.memory_space<vmem>>, vector<2x32xf32>,
    %c0_48 = arith.constant 0 : index
    %c0_49 = arith.constant 0 : index
    %116 = vector.load %arg5[%c0_48, %c0_49] : memref<32x32xf32, #tpu.memory_space<vmem>>, vector<32x32xf32>
    %117 = arith.truncf %116 : vector<32x32xf32> to vector<32x32xbf16>
    %c368 = arith.constant 368 : index
    %c0_50 = arith.constant 0 : index
    %118 = vector.load %arg2[%c368, %c0_50] : memref<400x128xbf16, #tpu.memory_space<vmem>>, vector<32x16xbf16>
    %cst_51 = arith.constant dense<0.000000e+00> : vector<32x16xf32>
    %119 = tpu.matmul %117, %118, %cst_51 {dimension_numbers = #tpu.dot_dimension_numbers<[1], [0], [0], [1], [0, 0, 1, 1], [], []>} : vector<32x32xbf16>, vector<32x16xbf16>, vector<32x16xf32> -> vector<32x16xf32>
    %c2_52 = arith.constant 2 : index
    %c0_53 = arith.constant 0 : index
    %120 = vector.load %arg3[%c2_52, %c0_53] : memref<8x128xf32, #tpu.memory_space<vmem>>, vector<1x16xf32>
    %121 = vector.broadcast %120 : vector<1x16xf32> to vector<32x16xf32>
    %122 = arith.addf %119, %121 : vector<32x16xf32>
    %c0_54 = arith.constant 0 : index
    %c0_55 = arith.constant 0 : index
    %123 = vector.load %arg4[%c0_54, %c0_55] : memref<32x16xf32, #tpu.memory_space<vmem>>, vector<32x16xf32>
    tpu.vector_store %arg4[%c0_54, %c0_55], %122 {strides = array<i32>} : memref<32x16xf32, #tpu.memory_space<vmem>>, vector<32x16xf32>,
    return
  }
}

</mosaic_0001>

<llo_original>
// kernel: _lambda_.1
$region0: #{_lambda_.1}
  #allocation0 [shape = 'u32[]', space=smem, size = 0x4, offset = 0x4, fixed_abs, tag = 'smem constant byte address 0x4 - core index']
  #allocation1 [shape = 'u32[144,128]{1,0:T(1,128)}', space=vmem, size = 0x12000, scoped, tag = 'internal scratch']
  #allocation2 [shape = 'f32[32,32]{1,0:T(8,128)}', space=vmem, size = 0x4000, scoped, tag = 'scratch operand']
  %s0 = inlined_call_operand.vmem [shape: bf16[32,192], index: 0, kind: input, shape index: {}]
  %s1 = inlined_call_operand.vmem [shape: bf16[32,8], index: 1, kind: input, shape index: {}]
  %s2 = inlined_call_operand.vmem [shape: bf16[400,128], index: 2, kind: input, shape index: {}]
  %s3 = inlined_call_operand.vmem [shape: f32[8,128], index: 3, kind: input, shape index: {}]
  %s4 = inlined_call_operand.vmem [shape: f32[32,16], index: 4, kind: output, shape index: {}]
  %s5 = sld [smem:[#allocation0]]
  $region26: #{_lambda_.1} parent=0
    _
  %s7 = ssub.s32 1, %s5
  %s8 = scalar_select 0, %s7, %s5
  // Predicated region
  $region2: #{_lambda_.1} parent=0 // pred_check
    _
  $region3: #{_lambda_.1} parent=0 // pred_check_branch
    %10 = sbr.rel (0) target = $region5
  $region4: #{_lambda_.1} parent=0 // pred_region
    _
  $region5: #{_lambda_.1} parent=0 // pred_fallthru
    _
  // Predicated region
  $region6: #{_lambda_.1} parent=0 // pred_check
    _
  $region7: #{_lambda_.1} parent=0 // pred_check_branch
    %12 = sbr.rel (0) target = $region9
  $region8: #{_lambda_.1} parent=0 // pred_region
    _
  $region9: #{_lambda_.1} parent=0 // pred_fallthru
    _
  // Predicated region
  $region10: #{_lambda_.1} parent=0 // pred_check
    _
  $region11: #{_lambda_.1} parent=0 // pred_check_branch
    %14 = sbr.rel (0) target = $region13
  $region12: #{_lambda_.1} parent=0 // pred_region
    _
  $region13: #{_lambda_.1} parent=0 // pred_fallthru
    _
  // Predicated region
  $region14: #{_lambda_.1} parent=0 // pred_check
    _
  $region15: #{_lambda_.1} parent=0 // pred_check_branch
    %16 = sbr.rel (0) target = $region17
  $region16: #{_lambda_.1} parent=0 // pred_region
    _
  $region17: #{_lambda_.1} parent=0 // pred_fallthru
    _
  %v18 = vld [vmem:[%s0] sm:$0xff]
  %v19 = vld [vmem:[%s0 + $0x8] sm:$0xff]
  %v20 = vld [vmem:[%s0 + $0x10] sm:$0xff]
  %v21 = vld [vmem:[%s0 + $0x18] sm:$0xff]
  %v22 = vld [vmem:[%s2] sm:$0xf]
  %v23 = vld [vmem:[%s2 + $0x4] sm:$0xf]
  %v24 = vld [vmem:[%s2 + $0x8] sm:$0xf]
  %v25 = vld [vmem:[%s2 + $0xc] sm:$0xf]
  %v26 = vld [vmem:[%s2 + $0x10] sm:$0xf]
  %v27 = vld [vmem:[%s2 + $0x14] sm:$0xf]
  %v28 = vld [vmem:[%s2 + $0x18] sm:$0xf]
  %v29 = vld [vmem:[%s2 + $0x1c] sm:$0xf]
  %v30 = vld [vmem:[%s2 + $0x20] sm:$0xf]
  %v31 = vld [vmem:[%s2 + $0x24] sm:$0xf]
  %v32 = vld [vmem:[%s2 + $0x28] sm:$0xf]
  %v33 = vld [vmem:[%s2 + $0x2c] sm:$0xf]
  %v34 = vld [vmem:[%s2 + $0x30] sm:$0xf]
  %v35 = vld [vmem:[%s2 + $0x34] sm:$0xf]
  %v36 = vld [vmem:[%s2 + $0x38] sm:$0xf]
  %v37 = vld [vmem:[%s2 + $0x3c] sm:$0xf]
  %v38 = vld [vmem:[%s2 + $0x40] sm:$0xf]
  %v39 = vld [vmem:[%s2 + $0x44] sm:$0xf]
  %v40 = vld [vmem:[%s2 + $0x48] sm:$0xf]
  %v41 = vld [vmem:[%s2 + $0x4c] sm:$0xf]
  %v42 = vld [vmem:[%s2 + $0x50] sm:$0xf]
  %v43 = vld [vmem:[%s2 + $0x54] sm:$0xf]
  %v44 = vld [vmem:[%s2 + $0x58] sm:$0xf]
  %v45 = vld [vmem:[%s2 + $0x5c] sm:$0xf]
  %v46 = vld [vmem:[%s3] sm:$0x1]
  %v47 = vlaneseq
  %v48 = vshrl.u32 %v47, 7
  %v49 = vsub.s32 0, %v48
  %v50 = vrot.slane %v46, %v49
  %v55 = vunpack.c.l.b16 %v18
  %v56 = vunpack.c.h.b16 %v18
  %v57 = vunpack.c.l.b16 %v19
  %v58 = vunpack.c.h.b16 %v19
  %v59 = vunpack.c.l.b16 %v20
  %v60 = vunpack.c.h.b16 %v20
  %v61 = vunpack.c.l.b16 %v21
  %v62 = vunpack.c.h.b16 %v21
  %v63 = vpack.c.b16 %v57, %v55
  %v64 = vpack.c.b16 %v58, %v56
  %v65 = vpack.c.b16 %v61, %v59
  %v66 = vpack.c.b16 %v62, %v60
  %v93 = vunpack.c.l.b16 %v22
  %v94 = vunpack.c.l.b16 %v23
  %v95 = vunpack.c.l.b16 %v24
  %v96 = vunpack.c.l.b16 %v25
  %v97 = vunpack.c.l.b16 %v26
  %v98 = vunpack.c.l.b16 %v27
  %v99 = vunpack.c.l.b16 %v28
  %v100 = vunpack.c.l.b16 %v29
  %v101 = vunpack.c.l.b16 %v30
  %v102 = vunpack.c.l.b16 %v31
  %v103 = vunpack.c.l.b16 %v32
  %v104 = vunpack.c.l.b16 %v33
  %v105 = vunpack.c.l.b16 %v34
  %v106 = vunpack.c.l.b16 %v35
  %v107 = vunpack.c.l.b16 %v36
  %v108 = vunpack.c.l.b16 %v37
  %v109 = vunpack.c.l.b16 %v38
  %v110 = vunpack.c.l.b16 %v39
  %v111 = vunpack.c.l.b16 %v40
  %v112 = vunpack.c.l.b16 %v41
  %v113 = vunpack.c.l.b16 %v42
  %v114 = vunpack.c.l.b16 %v43
  %v115 = vunpack.c.l.b16 %v44
  %v116 = vunpack.c.l.b16 %v45
  %v117 = vpack.c.b16 %v94, %v93
  %v118 = vpack.c.b16 %v96, %v95
  %v119 = vpack.c.b16 %v98, %v97
  %v120 = vpack.c.b16 %v100, %v99
  %v121 = vpack.c.b16 %v102, %v101
  %v122 = vpack.c.b16 %v104, %v103
  %v123 = vpack.c.b16 %v106, %v105
  %v124 = vpack.c.b16 %v108, %v107
  %v125 = vpack.c.b16 %v110, %v109
  %v126 = vpack.c.b16 %v112, %v111
  %v127 = vpack.c.b16 %v114, %v113
  %v128 = vpack.c.b16 %v116, %v115
  %vm141 = vcmask 523264
  %v143 = vsel %vm141, %v64, 0
  %v146 = vsel %vm141, %v66, 0
  %148 = vmatprep.subr.bf16.mxu0 0
  %149 = vmatpush1.bf16.msra.mxu0 %v124
  %150 = vmatprep.subr.bf16.mxu0 0
  %151 = vmatpush1.bf16.msra.mxu0 %v123
  %152 = vmatprep.subr.bf16.mxu0 0
  %153 = vmatpush1.bf16.msra.mxu0 %v122
  %154 = vmatprep.subr.bf16.mxu0 0
  %155 = vmatpush1.bf16.msra.mxu0 %v121
  %156 = vmatprep.subr.bf16.mxu0 0
  %157 = vmatpush1.bf16.msra.mxu0 %v120
  %158 = vmatprep.subr.bf16.mxu0 0
  %159 = vmatpush1.bf16.msra.mxu0 %v119
  %160 = vmatprep.subr.bf16.mxu0 0
  %161 = vmatpush1.bf16.msra.mxu0 %v118
  %162 = vmatprep.subr.bf16.mxu0 0
  %163 = vmatpush1.bf16.msra.mxu0 %v117
  %164 = vmatprep.subr.bf16.mxu0 0
  %165 = vmatpush2.bf16.msra.mxu0 0
  %166 = vmatprep.subr.bf16.mxu0 0
  %167 = vmatpush2.bf16.msra.mxu0 0
  %168 = vmatprep.subr.bf16.mxu0 0
  %169 = vmatpush2.bf16.msra.mxu0 0
  %170 = vmatprep.subr.bf16.mxu0 0
  %171 = vmatpush2.bf16.msra.mxu0 0
  %172 = vmatprep.subr.bf16.mxu0 0
  %173 = vmatpush2.bf16.msra.mxu0 %v128
  %174 = vmatprep.subr.bf16.mxu0 0
  %175 = vmatpush2.bf16.msra.mxu0 %v127
  %176 = vmatprep.subr.bf16.mxu0 0
  %177 = vmatpush2.bf16.msra.mxu0 %v126
  %178 = vmatprep.subr.bf16.mxu0 0
  %179 = vmatpush2.bf16.msra.mxu0 %v125
  %180 = vmatprep.mubr.bf16.mxu0 %v143
  %181 = vmatmul.mubr.bf16.gmra.mxu0 %v63
  %v182 = vpop.f32.mrf.mxu0
  %v183 = vadd.f32 %v50, %v182
  %v184 = vpop.f32.mrf.mxu0
  %v185 = vpop.f32.mrf.mxu0
  %v186 = vadd.f32 %v50, %v185
  %v187 = vpop.f32.mrf.mxu0
  %188 = vmatprep.mubr.bf16.mxu0 %v146
  %189 = vmatmul.mubr.bf16.gmra.mxu0 %v65
  %v190 = vpop.f32.mrf.mxu0
  %v191 = vadd.f32 %v50, %v190
  %v192 = vpop.f32.mrf.mxu0
  %v193 = vpop.f32.mrf.mxu0
  %v194 = vadd.f32 %v50, %v193
  %v195 = vpop.f32.mrf.mxu0
  %196 = vdwg.mxu0
  %v197 = vmax.f32 %v183, 0.0
  %v198 = vmax.f32 %v186, 0.0
  %v199 = vmax.f32 %v191, 0.0
  %v200 = vmax.f32 %v194, 0.0
  %v201 = vpack.c.bf16 %v198, %v197
  %v202 = vpack.c.bf16 %v200, %v199
  %v203 = vld [vmem:[%s2 + $0x60] sm:$0xf]
  %v204 = vld [vmem:[%s2 + $0x64] sm:$0xf]
  %v205 = vld [vmem:[%s2 + $0x68] sm:$0xf]
  %v206 = vld [vmem:[%s2 + $0x6c] sm:$0xf]
  %v207 = vld [vmem:[%s2 + $0x70] sm:$0xf]
  %v208 = vld [vmem:[%s2 + $0x74] sm:$0xf]
  %v209 = vld [vmem:[%s2 + $0x78] sm:$0xf]
  %v210 = vld [vmem:[%s2 + $0x7c] sm:$0xf]
  %v211 = vld [vmem:[%s2 + $0x80] sm:$0xf]
  %v212 = vld [vmem:[%s2 + $0x84] sm:$0xf]
  %v213 = vld [vmem:[%s2 + $0x88] sm:$0xf]
  %v214 = vld [vmem:[%s2 + $0x8c] sm:$0xf]
  %v215 = vld [vmem:[%s2 + $0x90] sm:$0xf]
  %v216 = vld [vmem:[%s2 + $0x94] sm:$0xf]
  %v217 = vld [vmem:[%s2 + $0x98] sm:$0xf]
  %v218 = vld [vmem:[%s2 + $0x9c] sm:$0xf]
  %v219 = vld [vmem:[%s1] sm:$0xf]
  %v220 = vld [vmem:[%s1 + $0x4] sm:$0xf]
  %v221 = vld [vmem:[%s1 + $0x8] sm:$0xf]
  %v222 = vld [vmem:[%s1 + $0xc] sm:$0xf]
  %v223 = vld [vmem:[%s2 + $0xa0] sm:$0xf]
  %v228 = vunpack.c.l.b16 %v219
  %v229 = vunpack.c.l.b16 %v220
  %v230 = vunpack.c.l.b16 %v221
  %v231 = vunpack.c.l.b16 %v222
  %v232 = vpack.c.b16 %v229, %v228
  %v233 = vpack.c.b16 %v231, %v230
  %vm234 = vcmask 64512
  %v236 = vsel %vm234, %v232, 0
  %v239 = vsel %vm234, %v233, 0
  %vm241 = vcmask 1043456
  %v243 = vsel %vm241, %v223, 0
  %245 = vmatprep.subr.bf16.mxu0 0
  %246 = vmatpush1.bf16.msra.mxu0 0
  %247 = vmatprep.subr.bf16.mxu0 0
  %248 = vmatpush1.bf16.msra.mxu0 0
  %249 = vmatprep.subr.bf16.mxu0 0
  %250 = vmatpush1.bf16.msra.mxu0 0
  %251 = vmatprep.subr.bf16.mxu0 0
  %252 = vmatpush1.bf16.msra.mxu0 0
  %253 = vmatprep.subr.bf16.mxu0 0
  %254 = vmatpush1.bf16.msra.mxu0 0
  %255 = vmatprep.subr.bf16.mxu0 0
  %256 = vmatpush1.bf16.msra.mxu0 0
  %257 = vmatprep.subr.bf16.mxu0 0
  %258 = vmatpush1.bf16.msra.mxu0 0
  %259 = vmatprep.subr.bf16.mxu0 0
  %260 = vmatpush1.bf16.msra.mxu0 %v243
  %261 = vmatprep.subr.bf16.mxu0 0
  %262 = vmatpush2.bf16.msra.mxu0 0
  %263 = vmatprep.subr.bf16.mxu0 0
  %264 = vmatpush2.bf16.msra.mxu0 0
  %265 = vmatprep.subr.bf16.mxu0 0
  %266 = vmatpush2.bf16.msra.mxu0 0
  %267 = vmatprep.subr.bf16.mxu0 0
  %268 = vmatpush2.bf16.msra.mxu0 0
  %269 = vmatprep.subr.bf16.mxu0 0
  %270 = vmatpush2.bf16.msra.mxu0 0
  %271 = vmatprep.subr.bf16.mxu0 0
  %272 = vmatpush2.bf16.msra.mxu0 0
  %273 = vmatprep.subr.bf16.mxu0 0
  %274 = vmatpush2.bf16.msra.mxu0 0
  %275 = vmatprep.subr.bf16.mxu0 0
  %276 = vmatpush2.bf16.msra.mxu0 0
  %277 = vmatprep.mubr.bf16.mxu0 0
  %278 = vmatmul.mubr.bf16.gmra.mxu0 %v236
  %v279 = vpop.f32.mrf.mxu0
  %v280 = vadd.f32 0.0, %v279
  %v281 = vpop.f32.mrf.mxu0
  %v282 = vpop.f32.mrf.mxu0
  %v283 = vadd.f32 0.0, %v282
  %v284 = vpop.f32.mrf.mxu0
  %285 = vmatprep.mubr.bf16.mxu0 0
  %286 = vmatmul.mubr.bf16.gmra.mxu0 %v239
  %v287 = vpop.f32.mrf.mxu0
  %v288 = vadd.f32 0.0, %v287
  %v289 = vpop.f32.mrf.mxu0
  %v290 = vpop.f32.mrf.mxu0
  %v291 = vadd.f32 0.0, %v290
  %v292 = vpop.f32.mrf.mxu0
  %293 = vdwg.mxu0
  %v310 = vunpack.c.l.b16 %v203
  %v311 = vunpack.c.l.b16 %v204
  %v312 = vunpack.c.l.b16 %v205
  %v313 = vunpack.c.l.b16 %v206
  %v314 = vunpack.c.l.b16 %v207
  %v315 = vunpack.c.l.b16 %v208
  %v316 = vunpack.c.l.b16 %v209
  %v317 = vunpack.c.l.b16 %v210
  %v318 = vunpack.c.l.b16 %v211
  %v319 = vunpack.c.l.b16 %v212
  %v320 = vunpack.c.l.b16 %v213
  %v321 = vunpack.c.l.b16 %v214
  %v322 = vunpack.c.l.b16 %v215
  %v323 = vunpack.c.l.b16 %v216
  %v324 = vunpack.c.l.b16 %v217
  %v325 = vunpack.c.l.b16 %v218
  %v326 = vpack.c.b16 %v311, %v310
  %v327 = vpack.c.b16 %v313, %v312
  %v328 = vpack.c.b16 %v315, %v314
  %v329 = vpack.c.b16 %v317, %v316
  %v330 = vpack.c.b16 %v319, %v318
  %v331 = vpack.c.b16 %v321, %v320
  %v332 = vpack.c.b16 %v323, %v322
  %v333 = vpack.c.b16 %v325, %v324
  %342 = vmatprep.subr.bf16.mxu0 0
  %343 = vmatpush1.bf16.msra.mxu0 %v333
  %344 = vmatprep.subr.bf16.mxu0 0
  %345 = vmatpush1.bf16.msra.mxu0 %v332
  %346 = vmatprep.subr.bf16.mxu0 0
  %347 = vmatpush1.bf16.msra.mxu0 %v331
  %348 = vmatprep.subr.bf16.mxu0 0
  %349 = vmatpush1.bf16.msra.mxu0 %v330
  %350 = vmatprep.subr.bf16.mxu0 0
  %351 = vmatpush1.bf16.msra.mxu0 %v329
  %352 = vmatprep.subr.bf16.mxu0 0
  %353 = vmatpush1.bf16.msra.mxu0 %v328
  %354 = vmatprep.subr.bf16.mxu0 0
  %355 = vmatpush1.bf16.msra.mxu0 %v327
  %356 = vmatprep.subr.bf16.mxu0 0
  %357 = vmatpush1.bf16.msra.mxu0 %v326
  %358 = vmatprep.subr.bf16.mxu0 0
  %359 = vmatpush2.bf16.msra.mxu0 0
  %360 = vmatprep.subr.bf16.mxu0 0
  %361 = vmatpush2.bf16.msra.mxu0 0
  %362 = vmatprep.subr.bf16.mxu0 0
  %363 = vmatpush2.bf16.msra.mxu0 0
  %364 = vmatprep.subr.bf16.mxu0 0
  %365 = vmatpush2.bf16.msra.mxu0 0
  %366 = vmatprep.subr.bf16.mxu0 0
  %367 = vmatpush2.bf16.msra.mxu0 0
  %368 = vmatprep.subr.bf16.mxu0 0
  %369 = vmatpush2.bf16.msra.mxu0 0
  %370 = vmatprep.subr.bf16.mxu0 0
  %371 = vmatpush2.bf16.msra.mxu0 0
  %372 = vmatprep.subr.bf16.mxu0 0
  %373 = vmatpush2.bf16.msra.mxu0 0
  %374 = vmatprep.mubr.bf16.mxu0 0
  %375 = vmatmul.mubr.bf16.gmra.mxu0 %v201
  %v376 = vpop.f32.mrf.mxu0
  %v377 = vadd.f32 %v280, %v376
  %v378 = vpop.f32.mrf.mxu0
  %v379 = vpop.f32.mrf.mxu0
  %v380 = vadd.f32 %v283, %v379
  %v381 = vpop.f32.mrf.mxu0
  %382 = vmatprep.mubr.bf16.mxu0 0
  %383 = vmatmul.mubr.bf16.gmra.mxu0 %v202
  %v384 = vpop.f32.mrf.mxu0
  %v385 = vadd.f32 %v288, %v384
  %v386 = vpop.f32.mrf.mxu0
  %v387 = vpop.f32.mrf.mxu0
  %v388 = vadd.f32 %v291, %v387
  %v389 = vpop.f32.mrf.mxu0
  %390 = vdwg.mxu0
  %v391 = vld [vmem:[%s3 + $0x1] sm:$0x1]
  %v392 = vlaneseq
  %v393 = vshrl.u32 %v392, 7
  %v394 = vsub.s32 0, %v393
  %v395 = vrot.slane %v391, %v394
  %v396 = vadd.f32 %v377, %v395
  %v397 = vadd.f32 %v380, %v395
  %v398 = vadd.f32 %v385, %v395
  %v399 = vadd.f32 %v388, %v395
  %v400 = vld [vmem:[%s2 + $0xa8] sm:$0xf]
  %v401 = vld [vmem:[%s2 + $0xac] sm:$0xf]
  %v402 = vld [vmem:[%s2 + $0xb0] sm:$0xf]
  %v403 = vld [vmem:[%s2 + $0xb4] sm:$0xf]
  %v408 = vunpack.c.l.b16 %v400
  %v409 = vunpack.c.l.b16 %v401
  %v410 = vunpack.c.l.b16 %v402
  %v411 = vunpack.c.l.b16 %v403
  %v412 = vpack.c.b16 %v409, %v408
  %v413 = vpack.c.b16 %v411, %v410
  %vm416 = vcmask 261120
  %v418 = vsel %vm416, 0, 0
  %420 = vmatprep.subr.bf16.mxu0 0
  %421 = vmatpush1.bf16.msra.mxu0 0
  %422 = vmatprep.subr.bf16.mxu0 0
  %423 = vmatpush1.bf16.msra.mxu0 0
  %424 = vmatprep.subr.bf16.mxu0 0
  %425 = vmatpush1.bf16.msra.mxu0 0
  %426 = vmatprep.subr.bf16.mxu0 0
  %427 = vmatpush1.bf16.msra.mxu0 0
  %428 = vmatprep.subr.bf16.mxu0 0
  %429 = vmatpush1.bf16.msra.mxu0 0
  %430 = vmatprep.subr.bf16.mxu0 0
  %431 = vmatpush1.bf16.msra.mxu0 0
  %432 = vmatprep.subr.bf16.mxu0 0
  %433 = vmatpush1.bf16.msra.mxu0 %v413
  %434 = vmatprep.subr.bf16.mxu0 0
  %435 = vmatpush1.bf16.msra.mxu0 %v412
  %436 = vmatprep.subr.bf16.mxu0 0
  %437 = vmatpush2.bf16.msra.mxu0 0
  %438 = vmatprep.subr.bf16.mxu0 0
  %439 = vmatpush2.bf16.msra.mxu0 0
  %440 = vmatprep.subr.bf16.mxu0 0
  %441 = vmatpush2.bf16.msra.mxu0 0
  %442 = vmatprep.subr.bf16.mxu0 0
  %443 = vmatpush2.bf16.msra.mxu0 0
  %444 = vmatprep.subr.bf16.mxu0 0
  %445 = vmatpush2.bf16.msra.mxu0 0
  %446 = vmatprep.subr.bf16.mxu0 0
  %447 = vmatpush2.bf16.msra.mxu0 0
  %448 = vmatprep.subr.bf16.mxu0 0
  %449 = vmatpush2.bf16.msra.mxu0 0
  %450 = vmatprep.subr.bf16.mxu0 0
  %451 = vmatpush2.bf16.msra.mxu0 0
  %452 = vmatprep.mubr.bf16.mxu0 0
  %453 = vmatmul.mubr.bf16.gmra.mxu0 %v418
  %v454 = vpop.f32.mrf.mxu0
  %v455 = vadd.f32 0.0, %v454
  %v456 = vpop.f32.mrf.mxu0
  %v457 = vpop.f32.mrf.mxu0
  %v458 = vpop.f32.mrf.mxu0
  %459 = vdwg.mxu0
  %v460 = vadd.f32 %v396, %v455
  %v461 = vtanh.pop %v460
  %vm462 = vcmask 254976
  %463 = vst.msk [vmem:[#allocation2] sm:$0x3] %vm462, %v461
  %v464 = vpack.c.bf16 %v461, %v461
  %v466 = vsel %vm416, %v464, 0
  %468 = vmatprep.subr.bf16.mxu0 0
  %469 = vmatpush1.bf16.msra.mxu0 0
  %470 = vmatprep.subr.bf16.mxu0 0
  %471 = vmatpush1.bf16.msra.mxu0 0
  %472 = vmatprep.subr.bf16.mxu0 0
  %473 = vmatpush1.bf16.msra.mxu0 0
  %474 = vmatprep.subr.bf16.mxu0 0
  %475 = vmatpush1.bf16.msra.mxu0 0
  %476 = vmatprep.subr.bf16.mxu0 0
  %477 = vmatpush1.bf16.msra.mxu0 0
  %478 = vmatprep.subr.bf16.mxu0 0
  %479 = vmatpush1.bf16.msra.mxu0 0
  %480 = vmatprep.subr.bf16.mxu0 0
  %481 = vmatpush1.bf16.msra.mxu0 %v413
  %482 = vmatprep.subr.bf16.mxu0 0
  %483 = vmatpush1.bf16.msra.mxu0 %v412
  %484 = vmatprep.subr.bf16.mxu0 0
  %485 = vmatpush2.bf16.msra.mxu0 0
  %486 = vmatprep.subr.bf16.mxu0 0
  %487 = vmatpush2.bf16.msra.mxu0 0
  %488 = vmatprep.subr.bf16.mxu0 0
  %489 = vmatpush2.bf16.msra.mxu0 0
  %490 = vmatprep.subr.bf16.mxu0 0
  %491 = vmatpush2.bf16.msra.mxu0 0
  %492 = vmatprep.subr.bf16.mxu0 0
  %493 = vmatpush2.bf16.msra.mxu0 0
  %494 = vmatprep.subr.bf16.mxu0 0
  %495 = vmatpush2.bf16.msra.mxu0 0
  %496 = vmatprep.subr.bf16.mxu0 0
  %497 = vmatpush2.bf16.msra.mxu0 0
  %498 = vmatprep.subr.bf16.mxu0 0
  %499 = vmatpush2.bf16.msra.mxu0 0
  %500 = vmatprep.mubr.bf16.mxu0 0
  %501 = vmatmul.mubr.bf16.gmra.mxu0 %v466
  %v502 = vpop.f32.mrf.mxu0
  %v503 = vadd.f32 0.0, %v502
  %v504 = vpop.f32.mrf.mxu0
  %v505 = vpop.f32.mrf.mxu0
  %v506 = vpop.f32.mrf.mxu0
  %507 = vdwg.mxu0
  %v509 = vrot.slane %v503, 6
  %v511 = vadd.f32 %v396, %v509
  %v512 = vtanh.pop %v511
  %vm513 = vcmask 257026
  %514 = vst.msk [vmem:[#allocation2] sm:$0xc] %vm513, %v512
  %v515 = vpack.c.bf16 %v512, %v512
  %v517 = vrot.slane %v515, 1
  %v519 = vsel %vm416, %v517, 0
  %521 = vmatprep.subr.bf16.mxu0 0
  %522 = vmatpush1.bf16.msra.mxu0 0
  %523 = vmatprep.subr.bf16.mxu0 0
  %524 = vmatpush1.bf16.msra.mxu0 0
  %525 = vmatprep.subr.bf16.mxu0 0
  %526 = vmatpush1.bf16.msra.mxu0 0
  %527 = vmatprep.subr.bf16.mxu0 0
  %528 = vmatpush1.bf16.msra.mxu0 0
  %529 = vmatprep.subr.bf16.mxu0 0
  %530 = vmatpush1.bf16.msra.mxu0 0
  %531 = vmatprep.subr.bf16.mxu0 0
  %532 = vmatpush1.bf16.msra.mxu0 0
  %533 = vmatprep.subr.bf16.mxu0 0
  %534 = vmatpush1.bf16.msra.mxu0 %v413
  %535 = vmatprep.subr.bf16.mxu0 0
  %536 = vmatpush1.bf16.msra.mxu0 %v412
  %537 = vmatprep.subr.bf16.mxu0 0
  %538 = vmatpush2.bf16.msra.mxu0 0
  %539 = vmatprep.subr.bf16.mxu0 0
  %540 = vmatpush2.bf16.msra.mxu0 0
  %541 = vmatprep.subr.bf16.mxu0 0
  %542 = vmatpush2.bf16.msra.mxu0 0
  %543 = vmatprep.subr.bf16.mxu0 0
  %544 = vmatpush2.bf16.msra.mxu0 0
  %545 = vmatprep.subr.bf16.mxu0 0
  %546 = vmatpush2.bf16.msra.mxu0 0
  %547 = vmatprep.subr.bf16.mxu0 0
  %548 = vmatpush2.bf16.msra.mxu0 0
  %549 = vmatprep.subr.bf16.mxu0 0
  %550 = vmatpush2.bf16.msra.mxu0 0
  %551 = vmatprep.subr.bf16.mxu0 0
  %552 = vmatpush2.bf16.msra.mxu0 0
  %553 = vmatprep.mubr.bf16.mxu0 0
  %554 = vmatmul.mubr.bf16.gmra.mxu0 %v519
  %v555 = vpop.f32.mrf.mxu0
  %v556 = vadd.f32 0.0, %v555
  %v557 = vpop.f32.mrf.mxu0
  %v558 = vpop.f32.mrf.mxu0
  %v559 = vpop.f32.mrf.mxu0
  %560 = vdwg.mxu0
  %v562 = vrot.slane %v556, 4
  %v564 = vadd.f32 %v396, %v562
  %v565 = vtanh.pop %v564
  %vm566 = vcmask 259076
  %567 = vst.msk [vmem:[#allocation2] sm:$0x30] %vm566, %v565
  %v568 = vpack.c.bf16 %v565, %v565
  %v570 = vrot.slane %v568, 2
  %v572 = vsel %vm416, %v570, 0
  %574 = vmatprep.subr.bf16.mxu0 0
  %575 = vmatpush1.bf16.msra.mxu0 0
  %576 = vmatprep.subr.bf16.mxu0 0
  %577 = vmatpush1.bf16.msra.mxu0 0
  %578 = vmatprep.subr.bf16.mxu0 0
  %579 = vmatpush1.bf16.msra.mxu0 0
  %580 = vmatprep.subr.bf16.mxu0 0
  %581 = vmatpush1.bf16.msra.mxu0 0
  %582 = vmatprep.subr.bf16.mxu0 0
  %583 = vmatpush1.bf16.msra.mxu0 0
  %584 = vmatprep.subr.bf16.mxu0 0
  %585 = vmatpush1.bf16.msra.mxu0 0
  %586 = vmatprep.subr.bf16.mxu0 0
  %587 = vmatpush1.bf16.msra.mxu0 %v413
  %588 = vmatprep.subr.bf16.mxu0 0
  %589 = vmatpush1.bf16.msra.mxu0 %v412
  %590 = vmatprep.subr.bf16.mxu0 0
  %591 = vmatpush2.bf16.msra.mxu0 0
  %592 = vmatprep.subr.bf16.mxu0 0
  %593 = vmatpush2.bf16.msra.mxu0 0
  %594 = vmatprep.subr.bf16.mxu0 0
  %595 = vmatpush2.bf16.msra.mxu0 0
  %596 = vmatprep.subr.bf16.mxu0 0
  %597 = vmatpush2.bf16.msra.mxu0 0
  %598 = vmatprep.subr.bf16.mxu0 0
  %599 = vmatpush2.bf16.msra.mxu0 0
  %600 = vmatprep.subr.bf16.mxu0 0
  %601 = vmatpush2.bf16.msra.mxu0 0
  %602 = vmatprep.subr.bf16.mxu0 0
  %603 = vmatpush2.bf16.msra.mxu0 0
  %604 = vmatprep.subr.bf16.mxu0 0
  %605 = vmatpush2.bf16.msra.mxu0 0
  %606 = vmatprep.mubr.bf16.mxu0 0
  %607 = vmatmul.mubr.bf16.gmra.mxu0 %v572
  %v608 = vpop.f32.mrf.mxu0
  %v609 = vadd.f32 0.0, %v608
  %v610 = vpop.f32.mrf.mxu0
  %v611 = vpop.f32.mrf.mxu0
  %v612 = vpop.f32.mrf.mxu0
  %613 = vdwg.mxu0
  %v615 = vrot.slane %v609, 2
  %v617 = vadd.f32 %v396, %v615
  %v618 = vtanh.pop %v617
  %vm619 = vcmask 261126
  %620 = vst.msk [vmem:[#allocation2] sm:$0xc0] %vm619, %v618
  %v621 = vpack.c.bf16 %v618, %v618
  %v623 = vrot.slane %v621, 3
  %v625 = vsel %vm416, %v623, 0
  %627 = vmatprep.subr.bf16.mxu0 0
  %628 = vmatpush1.bf16.msra.mxu0 0
  %629 = vmatprep.subr.bf16.mxu0 0
  %630 = vmatpush1.bf16.msra.mxu0 0
  %631 = vmatprep.subr.bf16.mxu0 0
  %632 = vmatpush1.bf16.msra.mxu0 0
  %633 = vmatprep.subr.bf16.mxu0 0
  %634 = vmatpush1.bf16.msra.mxu0 0
  %635 = vmatprep.subr.bf16.mxu0 0
  %636 = vmatpush1.bf16.msra.mxu0 0
  %637 = vmatprep.subr.bf16.mxu0 0
  %638 = vmatpush1.bf16.msra.mxu0 0
  %639 = vmatprep.subr.bf16.mxu0 0
  %640 = vmatpush1.bf16.msra.mxu0 %v413
  %641 = vmatprep.subr.bf16.mxu0 0
  %642 = vmatpush1.bf16.msra.mxu0 %v412
  %643 = vmatprep.subr.bf16.mxu0 0
  %644 = vmatpush2.bf16.msra.mxu0 0
  %645 = vmatprep.subr.bf16.mxu0 0
  %646 = vmatpush2.bf16.msra.mxu0 0
  %647 = vmatprep.subr.bf16.mxu0 0
  %648 = vmatpush2.bf16.msra.mxu0 0
  %649 = vmatprep.subr.bf16.mxu0 0
  %650 = vmatpush2.bf16.msra.mxu0 0
  %651 = vmatprep.subr.bf16.mxu0 0
  %652 = vmatpush2.bf16.msra.mxu0 0
  %653 = vmatprep.subr.bf16.mxu0 0
  %654 = vmatpush2.bf16.msra.mxu0 0
  %655 = vmatprep.subr.bf16.mxu0 0
  %656 = vmatpush2.bf16.msra.mxu0 0
  %657 = vmatprep.subr.bf16.mxu0 0
  %658 = vmatpush2.bf16.msra.mxu0 0
  %659 = vmatprep.mubr.bf16.mxu0 0
  %660 = vmatmul.mubr.bf16.gmra.mxu0 %v625
  %v661 = vpop.f32.mrf.mxu0
  %v662 = vadd.f32 0.0, %v661
  %v663 = vpop.f32.mrf.mxu0
  %v664 = vpop.f32.mrf.mxu0
  %v665 = vpop.f32.mrf.mxu0
  %666 = vdwg.mxu0
  %v667 = vadd.f32 %v397, %v662
  %v668 = vtanh.pop %v667
  %669 = vst.msk [vmem:[#allocation2 + $0x8] sm:$0x3] %vm462, %v668
  %v670 = vpack.c.bf16 %v668, %v668
  %v672 = vsel %vm416, %v670, 0
  %674 = vmatprep.subr.bf16.mxu0 0
  %675 = vmatpush1.bf16.msra.mxu0 0
  %676 = vmatprep.subr.bf16.mxu0 0
  %677 = vmatpush1.bf16.msra.mxu0 0
  %678 = vmatprep.subr.bf16.mxu0 0
  %679 = vmatpush1.bf16.msra.mxu0 0
  %680 = vmatprep.subr.bf16.mxu0 0
  %681 = vmatpush1.bf16.msra.mxu0 0
  %682 = vmatprep.subr.bf16.mxu0 0
  %683 = vmatpush1.bf16.msra.mxu0 0
  %684 = vmatprep.subr.bf16.mxu0 0
  %685 = vmatpush1.bf16.msra.mxu0 0
  %686 = vmatprep.subr.bf16.mxu0 0
  %687 = vmatpush1.bf16.msra.mxu0 %v413
  %688 = vmatprep.subr.bf16.mxu0 0
  %689 = vmatpush1.bf16.msra.mxu0 %v412
  %690 = vmatprep.subr.bf16.mxu0 0
  %691 = vmatpush2.bf16.msra.mxu0 0
  %692 = vmatprep.subr.bf16.mxu0 0
  %693 = vmatpush2.bf16.msra.mxu0 0
  %694 = vmatprep.subr.bf16.mxu0 0
  %695 = vmatpush2.bf16.msra.mxu0 0
  %696 = vmatprep.subr.bf16.mxu0 0
  %697 = vmatpush2.bf16.msra.mxu0 0
  %698 = vmatprep.subr.bf16.mxu0 0
  %699 = vmatpush2.bf16.msra.mxu0 0
  %700 = vmatprep.subr.bf16.mxu0 0
  %701 = vmatpush2.bf16.msra.mxu0 0
  %702 = vmatprep.subr.bf16.mxu0 0
  %703 = vmatpush2.bf16.msra.mxu0 0
  %704 = vmatprep.subr.bf16.mxu0 0
  %705 = vmatpush2.bf16.msra.mxu0 0
  %706 = vmatprep.mubr.bf16.mxu0 0
  %707 = vmatmul.mubr.bf16.gmra.mxu0 %v672
  %v708 = vpop.f32.mrf.mxu0
  %v709 = vadd.f32 0.0, %v708
  %v710 = vpop.f32.mrf.mxu0
  %v711 = vpop.f32.mrf.mxu0
  %v712 = vpop.f32.mrf.mxu0
  %713 = vdwg.mxu0
  %v715 = vrot.slane %v709, 6
  %v717 = vadd.f32 %v397, %v715
  %v718 = vtanh.pop %v717
  %719 = vst.msk [vmem:[#allocation2 + $0x8] sm:$0xc] %vm513, %v718
  %v720 = vpack.c.bf16 %v718, %v718
  %v722 = vrot.slane %v720, 1
  %v724 = vsel %vm416, %v722, 0
  %726 = vmatprep.subr.bf16.mxu0 0
  %727 = vmatpush1.bf16.msra.mxu0 0
  %728 = vmatprep.subr.bf16.mxu0 0
  %729 = vmatpush1.bf16.msra.mxu0 0
  %730 = vmatprep.subr.bf16.mxu0 0
  %731 = vmatpush1.bf16.msra.mxu0 0
  %732 = vmatprep.subr.bf16.mxu0 0
  %733 = vmatpush1.bf16.msra.mxu0 0
  %734 = vmatprep.subr.bf16.mxu0 0
  %735 = vmatpush1.bf16.msra.mxu0 0
  %736 = vmatprep.subr.bf16.mxu0 0
  %737 = vmatpush1.bf16.msra.mxu0 0
  %738 = vmatprep.subr.bf16.mxu0 0
  %739 = vmatpush1.bf16.msra.mxu0 %v413
  %740 = vmatprep.subr.bf16.mxu0 0
  %741 = vmatpush1.bf16.msra.mxu0 %v412
  %742 = vmatprep.subr.bf16.mxu0 0
  %743 = vmatpush2.bf16.msra.mxu0 0
  %744 = vmatprep.subr.bf16.mxu0 0
  %745 = vmatpush2.bf16.msra.mxu0 0
  %746 = vmatprep.subr.bf16.mxu0 0
  %747 = vmatpush2.bf16.msra.mxu0 0
  %748 = vmatprep.subr.bf16.mxu0 0
  %749 = vmatpush2.bf16.msra.mxu0 0
  %750 = vmatprep.subr.bf16.mxu0 0
  %751 = vmatpush2.bf16.msra.mxu0 0
  %752 = vmatprep.subr.bf16.mxu0 0
  %753 = vmatpush2.bf16.msra.mxu0 0
  %754 = vmatprep.subr.bf16.mxu0 0
  %755 = vmatpush2.bf16.msra.mxu0 0
  %756 = vmatprep.subr.bf16.mxu0 0
  %757 = vmatpush2.bf16.msra.mxu0 0
  %758 = vmatprep.mubr.bf16.mxu0 0
  %759 = vmatmul.mubr.bf16.gmra.mxu0 %v724
  %v760 = vpop.f32.mrf.mxu0
  %v761 = vadd.f32 0.0, %v760
  %v762 = vpop.f32.mrf.mxu0
  %v763 = vpop.f32.mrf.mxu0
  %v764 = vpop.f32.mrf.mxu0
  %765 = vdwg.mxu0
  %v767 = vrot.slane %v761, 4
  %v769 = vadd.f32 %v397, %v767
  %v770 = vtanh.pop %v769
  %771 = vst.msk [vmem:[#allocation2 + $0x8] sm:$0x30] %vm566, %v770
  %v772 = vpack.c.bf16 %v770, %v770
  %v774 = vrot.slane %v772, 2
  %v776 = vsel %vm416, %v774, 0
  %778 = vmatprep.subr.bf16.mxu0 0
  %779 = vmatpush1.bf16.msra.mxu0 0
  %780 = vmatprep.subr.bf16.mxu0 0
  %781 = vmatpush1.bf16.msra.mxu0 0
  %782 = vmatprep.subr.bf16.mxu0 0
  %783 = vmatpush1.bf16.msra.mxu0 0
  %784 = vmatprep.subr.bf16.mxu0 0
  %785 = vmatpush1.bf16.msra.mxu0 0
  %786 = vmatprep.subr.bf16.mxu0 0
  %787 = vmatpush1.bf16.msra.mxu0 0
  %788 = vmatprep.subr.bf16.mxu0 0
  %789 = vmatpush1.bf16.msra.mxu0 0
  %790 = vmatprep.subr.bf16.mxu0 0
  %791 = vmatpush1.bf16.msra.mxu0 %v413
  %792 = vmatprep.subr.bf16.mxu0 0
  %793 = vmatpush1.bf16.msra.mxu0 %v412
  %794 = vmatprep.subr.bf16.mxu0 0
  %795 = vmatpush2.bf16.msra.mxu0 0
  %796 = vmatprep.subr.bf16.mxu0 0
  %797 = vmatpush2.bf16.msra.mxu0 0
  %798 = vmatprep.subr.bf16.mxu0 0
  %799 = vmatpush2.bf16.msra.mxu0 0
  %800 = vmatprep.subr.bf16.mxu0 0
  %801 = vmatpush2.bf16.msra.mxu0 0
  %802 = vmatprep.subr.bf16.mxu0 0
  %803 = vmatpush2.bf16.msra.mxu0 0
  %804 = vmatprep.subr.bf16.mxu0 0
  %805 = vmatpush2.bf16.msra.mxu0 0
  %806 = vmatprep.subr.bf16.mxu0 0
  %807 = vmatpush2.bf16.msra.mxu0 0
  %808 = vmatprep.subr.bf16.mxu0 0
  %809 = vmatpush2.bf16.msra.mxu0 0
  %810 = vmatprep.mubr.bf16.mxu0 0
  %811 = vmatmul.mubr.bf16.gmra.mxu0 %v776
  %v812 = vpop.f32.mrf.mxu0
  %v813 = vadd.f32 0.0, %v812
  %v814 = vpop.f32.mrf.mxu0
  %v815 = vpop.f32.mrf.mxu0
  %v816 = vpop.f32.mrf.mxu0
  %817 = vdwg.mxu0
  %v819 = vrot.slane %v813, 2
  %v821 = vadd.f32 %v397, %v819
  %v822 = vtanh.pop %v821
  %823 = vst.msk [vmem:[#allocation2 + $0x8] sm:$0xc0] %vm619, %v822
  %v824 = vpack.c.bf16 %v822, %v822
  %v826 = vrot.slane %v824, 3
  %v828 = vsel %vm416, %v826, 0
  %830 = vmatprep.subr.bf16.mxu0 0
  %831 = vmatpush1.bf16.msra.mxu0 0
  %832 = vmatprep.subr.bf16.mxu0 0
  %833 = vmatpush1.bf16.msra.mxu0 0
  %834 = vmatprep.subr.bf16.mxu0 0
  %835 = vmatpush1.bf16.msra.mxu0 0
  %836 = vmatprep.subr.bf16.mxu0 0
  %837 = vmatpush1.bf16.msra.mxu0 0
  %838 = vmatprep.subr.bf16.mxu0 0
  %839 = vmatpush1.bf16.msra.mxu0 0
  %840 = vmatprep.subr.bf16.mxu0 0
  %841 = vmatpush1.bf16.msra.mxu0 0
  %842 = vmatprep.subr.bf16.mxu0 0
  %843 = vmatpush1.bf16.msra.mxu0 %v413
  %844 = vmatprep.subr.bf16.mxu0 0
  %845 = vmatpush1.bf16.msra.mxu0 %v412
  %846 = vmatprep.subr.bf16.mxu0 0
  %847 = vmatpush2.bf16.msra.mxu0 0
  %848 = vmatprep.subr.bf16.mxu0 0
  %849 = vmatpush2.bf16.msra.mxu0 0
  %850 = vmatprep.subr.bf16.mxu0 0
  %851 = vmatpush2.bf16.msra.mxu0 0
  %852 = vmatprep.subr.bf16.mxu0 0
  %853 = vmatpush2.bf16.msra.mxu0 0
  %854 = vmatprep.subr.bf16.mxu0 0
  %855 = vmatpush2.bf16.msra.mxu0 0
  %856 = vmatprep.subr.bf16.mxu0 0
  %857 = vmatpush2.bf16.msra.mxu0 0
  %858 = vmatprep.subr.bf16.mxu0 0
  %859 = vmatpush2.bf16.msra.mxu0 0
  %860 = vmatprep.subr.bf16.mxu0 0
  %861 = vmatpush2.bf16.msra.mxu0 0
  %862 = vmatprep.mubr.bf16.mxu0 0
  %863 = vmatmul.mubr.bf16.gmra.mxu0 %v828
  %v864 = vpop.f32.mrf.mxu0
  %v865 = vadd.f32 0.0, %v864
  %v866 = vpop.f32.mrf.mxu0
  %v867 = vpop.f32.mrf.mxu0
  %v868 = vpop.f32.mrf.mxu0
  %869 = vdwg.mxu0
  %v870 = vadd.f32 %v398, %v865
  %v871 = vtanh.pop %v870
  %872 = vst.msk [vmem:[#allocation2 + $0x10] sm:$0x3] %vm462, %v871
  %v873 = vpack.c.bf16 %v871, %v871
  %v875 = vsel %vm416, %v873, 0
  %877 = vmatprep.subr.bf16.mxu0 0
  %878 = vmatpush1.bf16.msra.mxu0 0
  %879 = vmatprep.subr.bf16.mxu0 0
  %880 = vmatpush1.bf16.msra.mxu0 0
  %881 = vmatprep.subr.bf16.mxu0 0
  %882 = vmatpush1.bf16.msra.mxu0 0
  %883 = vmatprep.subr.bf16.mxu0 0
  %884 = vmatpush1.bf16.msra.mxu0 0
  %885 = vmatprep.subr.bf16.mxu0 0
  %886 = vmatpush1.bf16.msra.mxu0 0
  %887 = vmatprep.subr.bf16.mxu0 0
  %888 = vmatpush1.bf16.msra.mxu0 0
  %889 = vmatprep.subr.bf16.mxu0 0
  %890 = vmatpush1.bf16.msra.mxu0 %v413
  %891 = vmatprep.subr.bf16.mxu0 0
  %892 = vmatpush1.bf16.msra.mxu0 %v412
  %893 = vmatprep.subr.bf16.mxu0 0
  %894 = vmatpush2.bf16.msra.mxu0 0
  %895 = vmatprep.subr.bf16.mxu0 0
  %896 = vmatpush2.bf16.msra.mxu0 0
  %897 = vmatprep.subr.bf16.mxu0 0
  %898 = vmatpush2.bf16.msra.mxu0 0
  %899 = vmatprep.subr.bf16.mxu0 0
  %900 = vmatpush2.bf16.msra.mxu0 0
  %901 = vmatprep.subr.bf16.mxu0 0
  %902 = vmatpush2.bf16.msra.mxu0 0
  %903 = vmatprep.subr.bf16.mxu0 0
  %904 = vmatpush2.bf16.msra.mxu0 0
  %905 = vmatprep.subr.bf16.mxu0 0
  %906 = vmatpush2.bf16.msra.mxu0 0
  %907 = vmatprep.subr.bf16.mxu0 0
  %908 = vmatpush2.bf16.msra.mxu0 0
  %909 = vmatprep.mubr.bf16.mxu0 0
  %910 = vmatmul.mubr.bf16.gmra.mxu0 %v875
  %v911 = vpop.f32.mrf.mxu0
  %v912 = vadd.f32 0.0, %v911
  %v913 = vpop.f32.mrf.mxu0
  %v914 = vpop.f32.mrf.mxu0
  %v915 = vpop.f32.mrf.mxu0
  %916 = vdwg.mxu0
  %v918 = vrot.slane %v912, 6
  %v920 = vadd.f32 %v398, %v918
  %v921 = vtanh.pop %v920
  %922 = vst.msk [vmem:[#allocation2 + $0x10] sm:$0xc] %vm513, %v921
  %v923 = vpack.c.bf16 %v921, %v921
  %v925 = vrot.slane %v923, 1
  %v927 = vsel %vm416, %v925, 0
  %929 = vmatprep.subr.bf16.mxu0 0
  %930 = vmatpush1.bf16.msra.mxu0 0
  %931 = vmatprep.subr.bf16.mxu0 0
  %932 = vmatpush1.bf16.msra.mxu0 0
  %933 = vmatprep.subr.bf16.mxu0 0
  %934 = vmatpush1.bf16.msra.mxu0 0
  %935 = vmatprep.subr.bf16.mxu0 0
  %936 = vmatpush1.bf16.msra.mxu0 0
  %937 = vmatprep.subr.bf16.mxu0 0
  %938 = vmatpush1.bf16.msra.mxu0 0
  %939 = vmatprep.subr.bf16.mxu0 0
  %940 = vmatpush1.bf16.msra.mxu0 0
  %941 = vmatprep.subr.bf16.mxu0 0
  %942 = vmatpush1.bf16.msra.mxu0 %v413
  %943 = vmatprep.subr.bf16.mxu0 0
  %944 = vmatpush1.bf16.msra.mxu0 %v412
  %945 = vmatprep.subr.bf16.mxu0 0
  %946 = vmatpush2.bf16.msra.mxu0 0
  %947 = vmatprep.subr.bf16.mxu0 0
  %948 = vmatpush2.bf16.msra.mxu0 0
  %949 = vmatprep.subr.bf16.mxu0 0
  %950 = vmatpush2.bf16.msra.mxu0 0
  %951 = vmatprep.subr.bf16.mxu0 0
  %952 = vmatpush2.bf16.msra.mxu0 0
  %953 = vmatprep.subr.bf16.mxu0 0
  %954 = vmatpush2.bf16.msra.mxu0 0
  %955 = vmatprep.subr.bf16.mxu0 0
  %956 = vmatpush2.bf16.msra.mxu0 0
  %957 = vmatprep.subr.bf16.mxu0 0
  %958 = vmatpush2.bf16.msra.mxu0 0
  %959 = vmatprep.subr.bf16.mxu0 0
  %960 = vmatpush2.bf16.msra.mxu0 0
  %961 = vmatprep.mubr.bf16.mxu0 0
  %962 = vmatmul.mubr.bf16.gmra.mxu0 %v927
  %v963 = vpop.f32.mrf.mxu0
  %v964 = vadd.f32 0.0, %v963
  %v965 = vpop.f32.mrf.mxu0
  %v966 = vpop.f32.mrf.mxu0
  %v967 = vpop.f32.mrf.mxu0
  %968 = vdwg.mxu0
  %v970 = vrot.slane %v964, 4
  %v972 = vadd.f32 %v398, %v970
  %v973 = vtanh.pop %v972
  %974 = vst.msk [vmem:[#allocation2 + $0x10] sm:$0x30] %vm566, %v973
  %v975 = vpack.c.bf16 %v973, %v973
  %v977 = vrot.slane %v975, 2
  %v979 = vsel %vm416, %v977, 0
  %981 = vmatprep.subr.bf16.mxu0 0
  %982 = vmatpush1.bf16.msra.mxu0 0
  %983 = vmatprep.subr.bf16.mxu0 0
  %984 = vmatpush1.bf16.msra.mxu0 0
  %985 = vmatprep.subr.bf16.mxu0 0
  %986 = vmatpush1.bf16.msra.mxu0 0
  %987 = vmatprep.subr.bf16.mxu0 0
  %988 = vmatpush1.bf16.msra.mxu0 0
  %989 = vmatprep.subr.bf16.mxu0 0
  %990 = vmatpush1.bf16.msra.mxu0 0
  %991 = vmatprep.subr.bf16.mxu0 0
  %992 = vmatpush1.bf16.msra.mxu0 0
  %993 = vmatprep.subr.bf16.mxu0 0
  %994 = vmatpush1.bf16.msra.mxu0 %v413
  %995 = vmatprep.subr.bf16.mxu0 0
  %996 = vmatpush1.bf16.msra.mxu0 %v412
  %997 = vmatprep.subr.bf16.mxu0 0
  %998 = vmatpush2.bf16.msra.mxu0 0
  %999 = vmatprep.subr.bf16.mxu0 0
  %1000 = vmatpush2.bf16.msra.mxu0 0
  %1001 = vmatprep.subr.bf16.mxu0 0
  %1002 = vmatpush2.bf16.msra.mxu0 0
  %1003 = vmatprep.subr.bf16.mxu0 0
  %1004 = vmatpush2.bf16.msra.mxu0 0
  %1005 = vmatprep.subr.bf16.mxu0 0
  %1006 = vmatpush2.bf16.msra.mxu0 0
  %1007 = vmatprep.subr.bf16.mxu0 0
  %1008 = vmatpush2.bf16.msra.mxu0 0
  %1009 = vmatprep.subr.bf16.mxu0 0
  %1010 = vmatpush2.bf16.msra.mxu0 0
  %1011 = vmatprep.subr.bf16.mxu0 0
  %1012 = vmatpush2.bf16.msra.mxu0 0
  %1013 = vmatprep.mubr.bf16.mxu0 0
  %1014 = vmatmul.mubr.bf16.gmra.mxu0 %v979
  %v1015 = vpop.f32.mrf.mxu0
  %v1016 = vadd.f32 0.0, %v1015
  %v1017 = vpop.f32.mrf.mxu0
  %v1018 = vpop.f32.mrf.mxu0
  %v1019 = vpop.f32.mrf.mxu0
  %1020 = vdwg.mxu0
  %v1022 = vrot.slane %v1016, 2
  %v1024 = vadd.f32 %v398, %v1022
  %v1025 = vtanh.pop %v1024
  %1026 = vst.msk [vmem:[#allocation2 + $0x10] sm:$0xc0] %vm619, %v1025
  %v1027 = vpack.c.bf16 %v1025, %v1025
  %v1029 = vrot.slane %v1027, 3
  %v1031 = vsel %vm416, %v1029, 0
  %1033 = vmatprep.subr.bf16.mxu0 0
  %1034 = vmatpush1.bf16.msra.mxu0 0
  %1035 = vmatprep.subr.bf16.mxu0 0
  %1036 = vmatpush1.bf16.msra.mxu0 0
  %1037 = vmatprep.subr.bf16.mxu0 0
  %1038 = vmatpush1.bf16.msra.mxu0 0
  %1039 = vmatprep.subr.bf16.mxu0 0
  %1040 = vmatpush1.bf16.msra.mxu0 0
  %1041 = vmatprep.subr.bf16.mxu0 0
  %1042 = vmatpush1.bf16.msra.mxu0 0
  %1043 = vmatprep.subr.bf16.mxu0 0
  %1044 = vmatpush1.bf16.msra.mxu0 0
  %1045 = vmatprep.subr.bf16.mxu0 0
  %1046 = vmatpush1.bf16.msra.mxu0 %v413
  %1047 = vmatprep.subr.bf16.mxu0 0
  %1048 = vmatpush1.bf16.msra.mxu0 %v412
  %1049 = vmatprep.subr.bf16.mxu0 0
  %1050 = vmatpush2.bf16.msra.mxu0 0
  %1051 = vmatprep.subr.bf16.mxu0 0
  %1052 = vmatpush2.bf16.msra.mxu0 0
  %1053 = vmatprep.subr.bf16.mxu0 0
  %1054 = vmatpush2.bf16.msra.mxu0 0
  %1055 = vmatprep.subr.bf16.mxu0 0
  %1056 = vmatpush2.bf16.msra.mxu0 0
  %1057 = vmatprep.subr.bf16.mxu0 0
  %1058 = vmatpush2.bf16.msra.mxu0 0
  %1059 = vmatprep.subr.bf16.mxu0 0
  %1060 = vmatpush2.bf16.msra.mxu0 0
  %1061 = vmatprep.subr.bf16.mxu0 0
  %1062 = vmatpush2.bf16.msra.mxu0 0
  %1063 = vmatprep.subr.bf16.mxu0 0
  %1064 = vmatpush2.bf16.msra.mxu0 0
  %1065 = vmatprep.mubr.bf16.mxu0 0
  %1066 = vmatmul.mubr.bf16.gmra.mxu0 %v1031
  %v1067 = vpop.f32.mrf.mxu0
  %v1068 = vadd.f32 0.0, %v1067
  %v1069 = vpop.f32.mrf.mxu0
  %v1070 = vpop.f32.mrf.mxu0
  %v1071 = vpop.f32.mrf.mxu0
  %1072 = vdwg.mxu0
  %v1073 = vadd.f32 %v399, %v1068
  %v1074 = vtanh.pop %v1073
  %1075 = vst.msk [vmem:[#allocation2 + $0x18] sm:$0x3] %vm462, %v1074
  %v1076 = vpack.c.bf16 %v1074, %v1074
  %v1078 = vsel %vm416, %v1076, 0
  %1080 = vmatprep.subr.bf16.mxu0 0
  %1081 = vmatpush1.bf16.msra.mxu0 0
  %1082 = vmatprep.subr.bf16.mxu0 0
  %1083 = vmatpush1.bf16.msra.mxu0 0
  %1084 = vmatprep.subr.bf16.mxu0 0
  %1085 = vmatpush1.bf16.msra.mxu0 0
  %1086 = vmatprep.subr.bf16.mxu0 0
  %1087 = vmatpush1.bf16.msra.mxu0 0
  %1088 = vmatprep.subr.bf16.mxu0 0
  %1089 = vmatpush1.bf16.msra.mxu0 0
  %1090 = vmatprep.subr.bf16.mxu0 0
  %1091 = vmatpush1.bf16.msra.mxu0 0
  %1092 = vmatprep.subr.bf16.mxu0 0
  %1093 = vmatpush1.bf16.msra.mxu0 %v413
  %1094 = vmatprep.subr.bf16.mxu0 0
  %1095 = vmatpush1.bf16.msra.mxu0 %v412
  %1096 = vmatprep.subr.bf16.mxu0 0
  %1097 = vmatpush2.bf16.msra.mxu0 0
  %1098 = vmatprep.subr.bf16.mxu0 0
  %1099 = vmatpush2.bf16.msra.mxu0 0
  %1100 = vmatprep.subr.bf16.mxu0 0
  %1101 = vmatpush2.bf16.msra.mxu0 0
  %1102 = vmatprep.subr.bf16.mxu0 0
  %1103 = vmatpush2.bf16.msra.mxu0 0
  %1104 = vmatprep.subr.bf16.mxu0 0
  %1105 = vmatpush2.bf16.msra.mxu0 0
  %1106 = vmatprep.subr.bf16.mxu0 0
  %1107 = vmatpush2.bf16.msra.mxu0 0
  %1108 = vmatprep.subr.bf16.mxu0 0
  %1109 = vmatpush2.bf16.msra.mxu0 0
  %1110 = vmatprep.subr.bf16.mxu0 0
  %1111 = vmatpush2.bf16.msra.mxu0 0
  %1112 = vmatprep.mubr.bf16.mxu0 0
  %1113 = vmatmul.mubr.bf16.gmra.mxu0 %v1078
  %v1114 = vpop.f32.mrf.mxu0
  %v1115 = vadd.f32 0.0, %v1114
  %v1116 = vpop.f32.mrf.mxu0
  %v1117 = vpop.f32.mrf.mxu0
  %v1118 = vpop.f32.mrf.mxu0
  %1119 = vdwg.mxu0
  %v1121 = vrot.slane %v1115, 6
  %v1123 = vadd.f32 %v399, %v1121
  %v1124 = vtanh.pop %v1123
  %1125 = vst.msk [vmem:[#allocation2 + $0x18] sm:$0xc] %vm513, %v1124
  %v1126 = vpack.c.bf16 %v1124, %v1124
  %v1128 = vrot.slane %v1126, 1
  %v1130 = vsel %vm416, %v1128, 0
  %1132 = vmatprep.subr.bf16.mxu0 0
  %1133 = vmatpush1.bf16.msra.mxu0 0
  %1134 = vmatprep.subr.bf16.mxu0 0
  %1135 = vmatpush1.bf16.msra.mxu0 0
  %1136 = vmatprep.subr.bf16.mxu0 0
  %1137 = vmatpush1.bf16.msra.mxu0 0
  %1138 = vmatprep.subr.bf16.mxu0 0
  %1139 = vmatpush1.bf16.msra.mxu0 0
  %1140 = vmatprep.subr.bf16.mxu0 0
  %1141 = vmatpush1.bf16.msra.mxu0 0
  %1142 = vmatprep.subr.bf16.mxu0 0
  %1143 = vmatpush1.bf16.msra.mxu0 0
  %1144 = vmatprep.subr.bf16.mxu0 0
  %1145 = vmatpush1.bf16.msra.mxu0 %v413
  %1146 = vmatprep.subr.bf16.mxu0 0
  %1147 = vmatpush1.bf16.msra.mxu0 %v412
  %1148 = vmatprep.subr.bf16.mxu0 0
  %1149 = vmatpush2.bf16.msra.mxu0 0
  %1150 = vmatprep.subr.bf16.mxu0 0
  %1151 = vmatpush2.bf16.msra.mxu0 0
  %1152 = vmatprep.subr.bf16.mxu0 0
  %1153 = vmatpush2.bf16.msra.mxu0 0
  %1154 = vmatprep.subr.bf16.mxu0 0
  %1155 = vmatpush2.bf16.msra.mxu0 0
  %1156 = vmatprep.subr.bf16.mxu0 0
  %1157 = vmatpush2.bf16.msra.mxu0 0
  %1158 = vmatprep.subr.bf16.mxu0 0
  %1159 = vmatpush2.bf16.msra.mxu0 0
  %1160 = vmatprep.subr.bf16.mxu0 0
  %1161 = vmatpush2.bf16.msra.mxu0 0
  %1162 = vmatprep.subr.bf16.mxu0 0
  %1163 = vmatpush2.bf16.msra.mxu0 0
  %1164 = vmatprep.mubr.bf16.mxu0 0
  %1165 = vmatmul.mubr.bf16.gmra.mxu0 %v1130
  %v1166 = vpop.f32.mrf.mxu0
  %v1167 = vadd.f32 0.0, %v1166
  %v1168 = vpop.f32.mrf.mxu0
  %v1169 = vpop.f32.mrf.mxu0
  %v1170 = vpop.f32.mrf.mxu0
  %1171 = vdwg.mxu0
  %v1173 = vrot.slane %v1167, 4
  %v1175 = vadd.f32 %v399, %v1173
  %v1176 = vtanh.pop %v1175
  %1177 = vst.msk [vmem:[#allocation2 + $0x18] sm:$0x30] %vm566, %v1176
  %v1178 = vpack.c.bf16 %v1176, %v1176
  %v1180 = vrot.slane %v1178, 2
  %v1182 = vsel %vm416, %v1180, 0
  %1184 = vmatprep.subr.bf16.mxu0 0
  %1185 = vmatpush1.bf16.msra.mxu0 0
  %1186 = vmatprep.subr.bf16.mxu0 0
  %1187 = vmatpush1.bf16.msra.mxu0 0
  %1188 = vmatprep.subr.bf16.mxu0 0
  %1189 = vmatpush1.bf16.msra.mxu0 0
  %1190 = vmatprep.subr.bf16.mxu0 0
  %1191 = vmatpush1.bf16.msra.mxu0 0
  %1192 = vmatprep.subr.bf16.mxu0 0
  %1193 = vmatpush1.bf16.msra.mxu0 0
  %1194 = vmatprep.subr.bf16.mxu0 0
  %1195 = vmatpush1.bf16.msra.mxu0 0
  %1196 = vmatprep.subr.bf16.mxu0 0
  %1197 = vmatpush1.bf16.msra.mxu0 %v413
  %1198 = vmatprep.subr.bf16.mxu0 0
  %1199 = vmatpush1.bf16.msra.mxu0 %v412
  %1200 = vmatprep.subr.bf16.mxu0 0
  %1201 = vmatpush2.bf16.msra.mxu0 0
  %1202 = vmatprep.subr.bf16.mxu0 0
  %1203 = vmatpush2.bf16.msra.mxu0 0
  %1204 = vmatprep.subr.bf16.mxu0 0
  %1205 = vmatpush2.bf16.msra.mxu0 0
  %1206 = vmatprep.subr.bf16.mxu0 0
  %1207 = vmatpush2.bf16.msra.mxu0 0
  %1208 = vmatprep.subr.bf16.mxu0 0
  %1209 = vmatpush2.bf16.msra.mxu0 0
  %1210 = vmatprep.subr.bf16.mxu0 0
  %1211 = vmatpush2.bf16.msra.mxu0 0
  %1212 = vmatprep.subr.bf16.mxu0 0
  %1213 = vmatpush2.bf16.msra.mxu0 0
  %1214 = vmatprep.subr.bf16.mxu0 0
  %1215 = vmatpush2.bf16.msra.mxu0 0
  %1216 = vmatprep.mubr.bf16.mxu0 0
  %1217 = vmatmul.mubr.bf16.gmra.mxu0 %v1182
  %v1218 = vpop.f32.mrf.mxu0
  %v1219 = vadd.f32 0.0, %v1218
  %v1220 = vpop.f32.mrf.mxu0
  %v1221 = vpop.f32.mrf.mxu0
  %v1222 = vpop.f32.mrf.mxu0
  %1223 = vdwg.mxu0
  %v1225 = vrot.slane %v1219, 2
  %v1227 = vadd.f32 %v399, %v1225
  %v1228 = vtanh.pop %v1227
  %1229 = vst.msk [vmem:[#allocation2 + $0x18] sm:$0xc0] %vm619, %v1228
  %v1230 = vld [vmem:[#allocation2] sm:$0xff]
  %v1231 = vld [vmem:[#allocation2 + $0x8] sm:$0xff]
  %v1232 = vld [vmem:[#allocation2 + $0x10] sm:$0xff]
  %v1233 = vld [vmem:[#allocation2 + $0x18] sm:$0xff]
  %v1234 = vpack.c.bf16 %v1231, %v1230
  %v1235 = vpack.c.bf16 %v1233, %v1232
  %v1236 = vld [vmem:[%s2 + $0xb8] sm:$0xf]
  %v1237 = vld [vmem:[%s2 + $0xbc] sm:$0xf]
  %v1238 = vld [vmem:[%s2 + $0xc0] sm:$0xf]
  %v1239 = vld [vmem:[%s2 + $0xc4] sm:$0xf]
  %v1240 = vld [vmem:[%s3 + $0x2] sm:$0x1]
  %v1241 = vlaneseq
  %v1242 = vshrl.u32 %v1241, 7
  %v1243 = vsub.s32 0, %v1242
  %v1244 = vrot.slane %v1240, %v1243
  %v1249 = vunpack.c.l.b16 %v1236
  %v1250 = vunpack.c.l.b16 %v1237
  %v1251 = vunpack.c.l.b16 %v1238
  %v1252 = vunpack.c.l.b16 %v1239
  %v1253 = vpack.c.b16 %v1250, %v1249
  %v1254 = vpack.c.b16 %v1252, %v1251
  %v1258 = vsel %vm416, %v1234, 0
  %v1261 = vsel %vm416, %v1235, 0
  %1263 = vmatprep.subr.bf16.mxu0 0
  %1264 = vmatpush1.bf16.msra.mxu0 0
  %1265 = vmatprep.subr.bf16.mxu0 0
  %1266 = vmatpush1.bf16.msra.mxu0 0
  %1267 = vmatprep.subr.bf16.mxu0 0
  %1268 = vmatpush1.bf16.msra.mxu0 0
  %1269 = vmatprep.subr.bf16.mxu0 0
  %1270 = vmatpush1.bf16.msra.mxu0 0
  %1271 = vmatprep.subr.bf16.mxu0 0
  %1272 = vmatpush1.bf16.msra.mxu0 0
  %1273 = vmatprep.subr.bf16.mxu0 0
  %1274 = vmatpush1.bf16.msra.mxu0 0
  %1275 = vmatprep.subr.bf16.mxu0 0
  %1276 = vmatpush1.bf16.msra.mxu0 %v1254
  %1277 = vmatprep.subr.bf16.mxu0 0
  %1278 = vmatpush1.bf16.msra.mxu0 %v1253
  %1279 = vmatprep.subr.bf16.mxu0 0
  %1280 = vmatpush2.bf16.msra.mxu0 0
  %1281 = vmatprep.subr.bf16.mxu0 0
  %1282 = vmatpush2.bf16.msra.mxu0 0
  %1283 = vmatprep.subr.bf16.mxu0 0
  %1284 = vmatpush2.bf16.msra.mxu0 0
  %1285 = vmatprep.subr.bf16.mxu0 0
  %1286 = vmatpush2.bf16.msra.mxu0 0
  %1287 = vmatprep.subr.bf16.mxu0 0
  %1288 = vmatpush2.bf16.msra.mxu0 0
  %1289 = vmatprep.subr.bf16.mxu0 0
  %1290 = vmatpush2.bf16.msra.mxu0 0
  %1291 = vmatprep.subr.bf16.mxu0 0
  %1292 = vmatpush2.bf16.msra.mxu0 0
  %1293 = vmatprep.subr.bf16.mxu0 0
  %1294 = vmatpush2.bf16.msra.mxu0 0
  %1295 = vmatprep.mubr.bf16.mxu0 0
  %1296 = vmatmul.mubr.bf16.gmra.mxu0 %v1258
  %v1297 = vpop.f32.mrf.mxu0
  %v1298 = vadd.f32 %v1244, %v1297
  %v1299 = vpop.f32.mrf.mxu0
  %v1300 = vpop.f32.mrf.mxu0
  %v1301 = vadd.f32 %v1244, %v1300
  %v1302 = vpop.f32.mrf.mxu0
  %1303 = vmatprep.mubr.bf16.mxu0 0
  %1304 = vmatmul.mubr.bf16.gmra.mxu0 %v1261
  %v1305 = vpop.f32.mrf.mxu0
  %v1306 = vadd.f32 %v1244, %v1305
  %v1307 = vpop.f32.mrf.mxu0
  %v1308 = vpop.f32.mrf.mxu0
  %v1309 = vadd.f32 %v1244, %v1308
  %v1310 = vpop.f32.mrf.mxu0
  %1311 = vdwg.mxu0
  %vm1312 = vcmask 130048
  %1313 = vst.msk [vmem:[%s4] sm:$0xff] %vm1312, %v1298
  %1314 = vst.msk [vmem:[%s4 + $0x8] sm:$0xff] %vm1312, %v1301
  %1315 = vst.msk [vmem:[%s4 + $0x10] sm:$0xff] %vm1312, %v1306
  %1316 = vst.msk [vmem:[%s4 + $0x18] sm:$0xff] %vm1312, %v1309
  // Predicated region
  $region18: #{_lambda_.1} parent=0 // pred_check
    _
  $region19: #{_lambda_.1} parent=0 // pred_check_branch
    %1318 = sbr.rel (0) target = $region21
  $region20: #{_lambda_.1} parent=0 // pred_region
    _
  $region21: #{_lambda_.1} parent=0 // pred_fallthru
    _
  // Predicated region
  $region22: #{_lambda_.1} parent=0 // pred_check
    _
  $region23: #{_lambda_.1} parent=0 // pred_check_branch
    %1320 = sbr.rel (0) target = $region25
  $region24: #{_lambda_.1} parent=0 // pred_region
    _
  $region25: #{_lambda_.1} parent=0 // pred_fallthru
    _

</llo_original>
